<compile_context>
chip_gen: v7x
topology: tpu7x:2x2x1
jax: 0.10.0
libtpu: 0.0.40
codegen_flags: <defaults>
</compile_context>

<pallas_src>
import math

import jax
import jax.numpy as jnp
from jax.experimental import pallas as pl
from jax.experimental.pallas import tpu as pltpu

INPUT_SIZE = 32
HIDDEN = (256, 256, 128, 128, 64)
BN_EPS = 1e-5
OUT_PAD = 128                               # lane-dense padded width of the scalar output
MAX_TILE_M = 256                            # batch rows processed per grid step
_BN_SCALE = 1.0 / math.sqrt(1.0 + BN_EPS)   # eval-mode BN with default running stats

# (K, N) of every MXU matmul actually issued by the kernel (after merging / padding).
_MXU_DIMS = ((32, 256), (256, 256), (256, 256), (256, 256),
             (128, 128), (128, 128), (128, 128), (128, 128),
             (64, 128), (64, 128))


# ----------------------------------------------------------------------------
# Pallas kernel: one batch tile through the whole network; weights carved out of
# two packed resident blobs with static (zero-cost) ref slices.
#
#   blob A (800, 256) bf16: W_in[0:32] | Wa0[32:288] | Wb0[288:544] | Wm1[544:800]
#   blob B (640, 128) bf16: Wb1[0:128] | Wa2[128:256] | Wb2[256:384] | Wm3[384:512]
#                           | Wb3pad[512:576] | Wout_pad[576:640]
#   bias   (10, 256)  f32 : one row per layer (zero padded to 256 lanes)
# ----------------------------------------------------------------------------
def _forward_kernel(x_ref, wa_ref, wb_ref, b_ref, o_ref):
    f32 = jnp.float32
    bf16 = jnp.bfloat16

    def dot(h, w):
        # bf16 x bf16 inputs, f32 accumulation on the MXU.
        return jnp.dot(h.astype(bf16), w, preferred_element_type=f32)

    def bias(row, n):
        # Load a full 256-lane bias row, then take the first n lanes (value slice).
        return b_ref[row:row + 1, :][:, :n]

    h = x_ref[...]                                                   # (TM, 32) f32

    # --- input layer: Linear + BN(folded) + ReLU (Dropout = identity in eval) ---
    h = jnp.maximum(dot(h, wa_ref[0:32, :]) + bias(0, 256), 0.0)     # (TM, 256)

    # --- block 0: 256 -> 256, identity shortcut ---
    out = jnp.maximum(dot(h, wa_ref[32:288, :]) + bias(1, 256), 0.0)
    out = dot(out, wa_ref[288:544, :]) + bias(2, 256)
    h = jnp.maximum(out + h, 0.0)

    # --- block 1: 256 -> 128, Linear shortcut merged into the first matmul ---
    t = dot(h, wa_ref[544:800, :]) + bias(3, 256)                    # (TM, 256)
    out = jnp.maximum(t[:, :128], 0.0)                               # main path
    identity = t[:, 128:]                                            # shortcut path
    out = dot(out, wb_ref[0:128, :]) + bias(4, 128)
    h = jnp.maximum(out + identity, 0.0)                             # (TM, 128)

    # --- block 2: 128 -> 128, identity shortcut ---
    out = jnp.maximum(dot(h, wb_ref[128:256, :]) + bias(5, 128), 0.0)
    out = dot(out, wb_ref[256:384, :]) + bias(6, 128)
    h = jnp.maximum(out + h, 0.0)

    # --- block 3: 128 -> 64, Linear shortcut merged into the first matmul ---
    t = dot(h, wb_ref[384:512, :]) + bias(7, 128)                    # (TM, 128)
    out = jnp.maximum(t[:, :64], 0.0)
    identity = t[:, 64:]
    out = dot(out, wb_ref[512:576, :])[:, :64] + bias(8, 64)         # padded weight
    h = jnp.maximum(out + identity, 0.0)                             # (TM, 64)

    # --- output layer: Linear(64, 1) padded lane-dense to 128 (column 0 is real) ---
    o_ref[...] = dot(h, wb_ref[576:640, :]) + bias(9, 128)           # (TM, 128)


# ----------------------------------------------------------------------------
# Parameter construction (mirrors the PyTorch _init_weights) + host-side packing
# ----------------------------------------------------------------------------
def make_raw_params(key):
    """Kaiming-normal (fan_in, relu) weights stored as (in, out); zero biases."""
    keys = iter(jax.random.split(key, 16))

    def lin(k, fin, fout):
        std = math.sqrt(2.0 / fin)
        w = jax.random.normal(k, (fin, fout), dtype=jnp.float32) * std
        b = jnp.zeros((fout,), dtype=jnp.float32)
        return w, b

    raw = {"in": lin(next(keys), INPUT_SIZE, HIDDEN[0])}
    blocks = []
    for fin, fout in zip(HIDDEN[:-1], HIDDEN[1:]):
        wa, ba = lin(next(keys), fin, fout)
        wb, bb = lin(next(keys), fout, fout)
        sc = lin(next(keys), fin, fout) if fin != fout else None
        blocks.append((wa, ba, wb, bb, sc))
    raw["blocks"] = blocks
    raw["out"] = lin(next(keys), HIDDEN[-1], 1)
    return raw


def pack_params(raw):
    """Fold eval-mode BN into the Linears, merge shortcuts, pad, and pack blobs."""
    s = _BN_SCALE

    def fold(w, b):
        # y = BN(x @ W + b) = x @ (W*s) + (b*s)   (gamma=1, beta=0, mean=0, var=1)
        # TODO(synk): for a trained checkpoint fold the actual running stats / affine.
        return w * s, b * s

    w_in, b_in = fold(*raw["in"])
    blk0, blk1, blk2, blk3 = raw["blocks"]

    wa0, ba0 = fold(blk0[0], blk0[1]); wb0, bb0 = fold(blk0[2], blk0[3])

    wa1, ba1 = fold(blk1[0], blk1[1]); wb1, bb1 = fold(blk1[2], blk1[3])
    wsc1, bsc1 = blk1[4]                                 # bare Linear shortcut (no BN)
    wm1 = jnp.concatenate([wa1, wsc1], axis=1)           # (256, 256)
    bm1 = jnp.concatenate([ba1, bsc1], axis=0)           # (256,)

    wa2, ba2 = fold(blk2[0], blk2[1]); wb2, bb2 = fold(blk2[2], blk2[3])

    wa3, ba3 = fold(blk3[0], blk3[1]); wb3, bb3 = fold(blk3[2], blk3[3])
    wsc3, bsc3 = blk3[4]
    wm3 = jnp.concatenate([wa3, wsc3], axis=1)           # (128, 128)
    bm3 = jnp.concatenate([ba3, bsc3], axis=0)           # (128,)
    wb3p = jnp.pad(wb3, ((0, 0), (0, 128 - wb3.shape[1])))       # (64, 128)

    w_out, b_out = raw["out"]
    w_outp = jnp.pad(w_out, ((0, 0), (0, OUT_PAD - 1)))          # (64, 128)
    b_outp = jnp.pad(b_out, (0, OUT_PAD - 1))                    # (128,)

    blob_a = jnp.concatenate([w_in, wa0, wb0, wm1], axis=0).astype(jnp.bfloat16)   # (800, 256)
    blob_b = jnp.concatenate([wb1, wa2, wb2, wm3, wb3p, w_outp],
                             axis=0).astype(jnp.bfloat16)                          # (640, 128)

    def row(b):
        return jnp.pad(b, (0, 256 - b.shape[0]))

    bias = jnp.stack([row(b_in), row(ba0), row(bb0), row(bm1),
                      row(bb1), row(ba2), row(bb2), row(bm3),
                      row(bb3), row(b_outp)], axis=0).astype(jnp.float32)          # (10, 256)
    return blob_a, blob_b, bias


# ----------------------------------------------------------------------------
# Wrapper: batch grid, weights resident across grid steps
# ----------------------------------------------------------------------------
def _forward(x, blob_a, blob_b, bias):
    batch = x.shape[0]
    # Batch tile: multiple of 8 sublanes, capped at MAX_TILE_M.
    tm = min(MAX_TILE_M, ((batch + 7) // 8) * 8)
    padded = pl.cdiv(batch, tm) * tm
    if padded != batch:
        x = jnp.pad(x, ((0, padded - batch), (0, 0)))
    grid = (padded // tm,)

    # Weights/bias: constant index_map -> DMA'd once, resident across grid steps.
    resident_a = pl.BlockSpec(blob_a.shape, lambda i: (0, 0))
    resident_b = pl.BlockSpec(blob_b.shape, lambda i: (0, 0))
    resident_bias = pl.BlockSpec(bias.shape, lambda i: (0, 0))

    flops = 2 * padded * sum(k * n for k, n in _MXU_DIMS)
    bytes_accessed = (blob_a.size * 2 + blob_b.size * 2 + bias.size * 4
                      + padded * INPUT_SIZE * 4 + padded * OUT_PAD * 4)

    out = pl.pallas_call(
        _forward_kernel,
        out_shape=jax.ShapeDtypeStruct((padded, OUT_PAD), jnp.float32),
        grid_spec=pltpu.PrefetchScalarGridSpec(
            num_scalar_prefetch=0,
            grid=grid,
            in_specs=[
                pl.BlockSpec((tm, INPUT_SIZE), lambda i: (i, 0)),   # x: tiled on batch
                resident_a,                                         # blob_a
                resident_b,                                         # blob_b
                resident_bias,                                      # bias
            ],
            out_specs=pl.BlockSpec((tm, OUT_PAD), lambda i: (i, 0)),
        ),
        compiler_params=pltpu.CompilerParams(
            dimension_semantics=("parallel",)),
        cost_estimate=pl.CostEstimate(flops=flops, transcendentals=0,
                                      bytes_accessed=bytes_accessed),
    )(x, blob_a, blob_b, bias)
    # PyTorch forward returns x.squeeze(): (B, 1) -> (B,); column 0 holds the result.
    return out[:batch, 0]


advanced_house_price_nn = jax.jit(_forward)


# ----------------------------------------------------------------------------
# Pure-JAX references
# ----------------------------------------------------------------------------
def reference_f32(x, raw):
    """Original (un-folded, f32) eval-mode semantics of the PyTorch module."""
    s = _BN_SCALE
    w_in, b_in = raw["in"]
    h = jnp.maximum((x @ w_in + b_in) * s, 0.0)
    for wa, ba, wb, bb, sc in raw["blocks"]:
        identity = h if sc is None else h @ sc[0] + sc[1]
        out = jnp.maximum((h @ wa + ba) * s, 0.0)
        out = (out @ wb + bb) * s
        h = jnp.maximum(out + identity, 0.0)
    w_out, b_out = raw["out"]
    return jnp.squeeze(h @ w_out + b_out, axis=-1)


def reference_packed(x, blob_a, blob_b, bias):
    """Same math as the kernel (packed bf16 weights, f32 accumulation)."""
    def dot(h, w):
        return jnp.dot(h.astype(jnp.bfloat16), w, preferred_element_type=jnp.float32)

    def b(row, n):
        return bias[row:row + 1, :n]

    h = x
    h = jnp.maximum(dot(h, blob_a[0:32]) + b(0, 256), 0.0)
    out = jnp.maximum(dot(h, blob_a[32:288]) + b(1, 256), 0.0)
    out = dot(out, blob_a[288:544]) + b(2, 256)
    h = jnp.maximum(out + h, 0.0)
    t = dot(h, blob_a[544:800]) + b(3, 256)
    out = jnp.maximum(t[:, :128], 0.0); identity = t[:, 128:]
    out = dot(out, blob_b[0:128]) + b(4, 128)
    h = jnp.maximum(out + identity, 0.0)
    out = jnp.maximum(dot(h, blob_b[128:256]) + b(5, 128), 0.0)
    out = dot(out, blob_b[256:384]) + b(6, 128)
    h = jnp.maximum(out + h, 0.0)
    t = dot(h, blob_b[384:512]) + b(7, 128)
    out = jnp.maximum(t[:, :64], 0.0); identity = t[:, 64:]
    out = dot(out, blob_b[512:576])[:, :64] + b(8, 64)
    h = jnp.maximum(out + identity, 0.0)
    return (dot(h, blob_b[576:640]) + b(9, 128))[:, 0]


if __name__ == "__main__":
    key = jax.random.PRNGKey(0)
    kx, kp, kx2 = jax.random.split(key, 3)

    raw = make_raw_params(kp)
    blob_a, blob_b, bias = pack_params(raw)

    # --- small batch (single grid step) ---
    batch = 8
    x = jax.random.normal(kx, (batch, INPUT_SIZE), dtype=jnp.float32)
    y = advanced_house_price_nn(x, blob_a, blob_b, bias)
    y = jax.block_until_ready(y)
    assert y.shape == (batch,), y.shape

    # Tight check against a pure-JAX version of the exact kernel math (bf16 weights).
    y_pk = reference_packed(x, blob_a, blob_b, bias)
    assert jnp.allclose(y, y_pk, atol=2e-3, rtol=2e-3), (y, y_pk)
    # Loose check against the original f32 eval-mode semantics (bf16 weight rounding).
    y_f32 = reference_f32(x, raw)
    assert jnp.allclose(y, y_f32, atol=1e-1, rtol=1e-1), (y, y_f32)

    # --- larger batch: exercises the batch grid with resident weights + padding ---
    batch2 = 520                      # non-multiple of the 256-row tile on purpose
    x2 = jax.random.normal(kx2, (batch2, INPUT_SIZE), dtype=jnp.float32)
    y2 = advanced_house_price_nn(x2, blob_a, blob_b, bias)
    y2 = jax.block_until_ready(y2)
    assert y2.shape == (batch2,), y2.shape
    y2_pk = reference_packed(x2, blob_a, blob_b, bias)
    assert jnp.allclose(y2, y2_pk, atol=2e-3, rtol=2e-3)
    y2_f32 = reference_f32(x2, raw)
    assert jnp.allclose(y2, y2_f32, atol=1e-1, rtol=1e-1)

    print("KERNEL_OK")
</pallas_src>

<mosaic_0001>
module attributes {stable_mosaic.version = 11 : i64} {
  func.func @_forward_kernel(%arg0: i32, %arg1: memref<8x32xf32, #tpu.memory_space<vmem>>, %arg2: memref<800x256xbf16, #tpu.memory_space<vmem>>, %arg3: memref<640x128xbf16, #tpu.memory_space<vmem>>, %arg4: memref<10x256xf32, #tpu.memory_space<vmem>>, %arg5: memref<8x128xf32, #tpu.memory_space<vmem>>) attributes {dimension_semantics = [#tpu.dimension_semantics<parallel>], iteration_bounds = array<i64: 1>, scalar_prefetch = 0 : i64, scratch_operands = 0 : i64, tpu.core_type = #tpu.core_type<tc>, window_params = [{transform_indices = @transform_0, window_bounds = array<i64: 8, 32>}, {pipeline_mode = #tpu.pipeline_mode<synchronous>, transform_indices = @transform_1, window_bounds = array<i64: 800, 256>}, {pipeline_mode = #tpu.pipeline_mode<synchronous>, transform_indices = @transform_2, window_bounds = array<i64: 640, 128>}, {pipeline_mode = #tpu.pipeline_mode<synchronous>, transform_indices = @transform_3, window_bounds = array<i64: 10, 256>}, {transform_indices = @transform_4, window_bounds = array<i64: 8, 128>}]} {
    %c0 = arith.constant 0 : index
    %c0_0 = arith.constant 0 : index
    %0 = vector.load %arg1[%c0, %c0_0] : memref<8x32xf32, #tpu.memory_space<vmem>>, vector<8x32xf32>
    %c0_1 = arith.constant 0 : index
    %c0_2 = arith.constant 0 : index
    %1 = vector.load %arg2[%c0_1, %c0_2] : memref<800x256xbf16, #tpu.memory_space<vmem>>, vector<32x256xbf16>
    %2 = arith.truncf %0 : vector<8x32xf32> to vector<8x32xbf16>
    %cst = arith.constant dense<0.000000e+00> : vector<8x256xf32>
    %3 = tpu.matmul %2, %1, %cst {dimension_numbers = #tpu.dot_dimension_numbers<[1], [0], [0], [1], [0, 0, 1, 1], [], []>} : vector<8x32xbf16>, vector<32x256xbf16>, vector<8x256xf32> -> vector<8x256xf32>
    %c0_3 = arith.constant 0 : index
    %c0_4 = arith.constant 0 : index
    %4 = vector.load %arg4[%c0_3, %c0_4] : memref<10x256xf32, #tpu.memory_space<vmem>>, vector<1x256xf32>
    %5 = vector.broadcast %4 : vector<1x256xf32> to vector<8x256xf32>
    %6 = arith.addf %3, %5 : vector<8x256xf32>
    %cst_5 = arith.constant 0.000000e+00 : f32
    %7 = vector.broadcast %cst_5 : f32 to vector<8x256xf32>
    %8 = arith.maximumf %6, %7 : vector<8x256xf32>
    %c32 = arith.constant 32 : index
    %c0_6 = arith.constant 0 : index
    %9 = vector.load %arg2[%c32, %c0_6] : memref<800x256xbf16, #tpu.memory_space<vmem>>, vector<256x256xbf16>
    %10 = arith.truncf %8 : vector<8x256xf32> to vector<8x256xbf16>
    %cst_7 = arith.constant dense<0.000000e+00> : vector<8x256xf32>
    %11 = tpu.matmul %10, %9, %cst_7 {dimension_numbers = #tpu.dot_dimension_numbers<[1], [0], [0], [1], [0, 0, 1, 1], [], []>} : vector<8x256xbf16>, vector<256x256xbf16>, vector<8x256xf32> -> vector<8x256xf32>
    %c1 = arith.constant 1 : index
    %c0_8 = arith.constant 0 : index
    %12 = vector.load %arg4[%c1, %c0_8] : memref<10x256xf32, #tpu.memory_space<vmem>>, vector<1x256xf32>
    %13 = vector.broadcast %12 : vector<1x256xf32> to vector<8x256xf32>
    %14 = arith.addf %11, %13 : vector<8x256xf32>
    %cst_9 = arith.constant 0.000000e+00 : f32
    %15 = vector.broadcast %cst_9 : f32 to vector<8x256xf32>
    %16 = arith.maximumf %14, %15 : vector<8x256xf32>
    %c288 = arith.constant 288 : index
    %c0_10 = arith.constant 0 : index
    %17 = vector.load %arg2[%c288, %c0_10] : memref<800x256xbf16, #tpu.memory_space<vmem>>, vector<256x256xbf16>
    %18 = arith.truncf %16 : vector<8x256xf32> to vector<8x256xbf16>
    %cst_11 = arith.constant dense<0.000000e+00> : vector<8x256xf32>
    %19 = tpu.matmul %18, %17, %cst_11 {dimension_numbers = #tpu.dot_dimension_numbers<[1], [0], [0], [1], [0, 0, 1, 1], [], []>} : vector<8x256xbf16>, vector<256x256xbf16>, vector<8x256xf32> -> vector<8x256xf32>
    %c2 = arith.constant 2 : index
    %c0_12 = arith.constant 0 : index
    %20 = vector.load %arg4[%c2, %c0_12] : memref<10x256xf32, #tpu.memory_space<vmem>>, vector<1x256xf32>
    %21 = vector.broadcast %20 : vector<1x256xf32> to vector<8x256xf32>
    %22 = arith.addf %19, %21 : vector<8x256xf32>
    %23 = arith.addf %22, %8 : vector<8x256xf32>
    %cst_13 = arith.constant 0.000000e+00 : f32
    %24 = vector.broadcast %cst_13 : f32 to vector<8x256xf32>
    %25 = arith.maximumf %23, %24 : vector<8x256xf32>
    %c544 = arith.constant 544 : index
    %c0_14 = arith.constant 0 : index
    %26 = vector.load %arg2[%c544, %c0_14] : memref<800x256xbf16, #tpu.memory_space<vmem>>, vector<256x256xbf16>
    %27 = arith.truncf %25 : vector<8x256xf32> to vector<8x256xbf16>
    %cst_15 = arith.constant dense<0.000000e+00> : vector<8x256xf32>
    %28 = tpu.matmul %27, %26, %cst_15 {dimension_numbers = #tpu.dot_dimension_numbers<[1], [0], [0], [1], [0, 0, 1, 1], [], []>} : vector<8x256xbf16>, vector<256x256xbf16>, vector<8x256xf32> -> vector<8x256xf32>
    %c3 = arith.constant 3 : index
    %c0_16 = arith.constant 0 : index
    %29 = vector.load %arg4[%c3, %c0_16] : memref<10x256xf32, #tpu.memory_space<vmem>>, vector<1x256xf32>
    %30 = vector.broadcast %29 : vector<1x256xf32> to vector<8x256xf32>
    %31 = arith.addf %28, %30 : vector<8x256xf32>
    %32 = vector.extract_strided_slice %31 {offsets = [0, 0], sizes = [8, 128], strides = [1, 1]} : vector<8x256xf32> to vector<8x128xf32>
    %cst_17 = arith.constant 0.000000e+00 : f32
    %33 = vector.broadcast %cst_17 : f32 to vector<8x128xf32>
    %34 = arith.maximumf %32, %33 : vector<8x128xf32>
    %35 = vector.extract_strided_slice %31 {offsets = [0, 128], sizes = [8, 128], strides = [1, 1]} : vector<8x256xf32> to vector<8x128xf32>
    %c0_18 = arith.constant 0 : index
    %c0_19 = arith.constant 0 : index
    %36 = vector.load %arg3[%c0_18, %c0_19] : memref<640x128xbf16, #tpu.memory_space<vmem>>, vector<128x128xbf16>
    %37 = arith.truncf %34 : vector<8x128xf32> to vector<8x128xbf16>
    %cst_20 = arith.constant dense<0.000000e+00> : vector<8x128xf32>
    %38 = tpu.matmul %37, %36, %cst_20 {dimension_numbers = #tpu.dot_dimension_numbers<[1], [0], [0], [1], [0, 0, 1, 1], [], []>} : vector<8x128xbf16>, vector<128x128xbf16>, vector<8x128xf32> -> vector<8x128xf32>
    %c4 = arith.constant 4 : index
    %c0_21 = arith.constant 0 : index
    %39 = vector.load %arg4[%c4, %c0_21] : memref<10x256xf32, #tpu.memory_space<vmem>>, vector<1x256xf32>
    %40 = vector.extract_strided_slice %39 {offsets = [0, 0], sizes = [1, 128], strides = [1, 1]} : vector<1x256xf32> to vector<1x128xf32>
    %41 = vector.broadcast %40 : vector<1x128xf32> to vector<8x128xf32>
    %42 = arith.addf %38, %41 : vector<8x128xf32>
    %43 = arith.addf %42, %35 : vector<8x128xf32>
    %cst_22 = arith.constant 0.000000e+00 : f32
    %44 = vector.broadcast %cst_22 : f32 to vector<8x128xf32>
    %45 = arith.maximumf %43, %44 : vector<8x128xf32>
    %c128 = arith.constant 128 : index
    %c0_23 = arith.constant 0 : index
    %46 = vector.load %arg3[%c128, %c0_23] : memref<640x128xbf16, #tpu.memory_space<vmem>>, vector<128x128xbf16>
    %47 = arith.truncf %45 : vector<8x128xf32> to vector<8x128xbf16>
    %cst_24 = arith.constant dense<0.000000e+00> : vector<8x128xf32>
    %48 = tpu.matmul %47, %46, %cst_24 {dimension_numbers = #tpu.dot_dimension_numbers<[1], [0], [0], [1], [0, 0, 1, 1], [], []>} : vector<8x128xbf16>, vector<128x128xbf16>, vector<8x128xf32> -> vector<8x128xf32>
    %c5 = arith.constant 5 : index
    %c0_25 = arith.constant 0 : index
    %49 = vector.load %arg4[%c5, %c0_25] : memref<10x256xf32, #tpu.memory_space<vmem>>, vector<1x256xf32>
    %50 = vector.extract_strided_slice %49 {offsets = [0, 0], sizes = [1, 128], strides = [1, 1]} : vector<1x256xf32> to vector<1x128xf32>
    %51 = vector.broadcast %50 : vector<1x128xf32> to vector<8x128xf32>
    %52 = arith.addf %48, %51 : vector<8x128xf32>
    %cst_26 = arith.constant 0.000000e+00 : f32
    %53 = vector.broadcast %cst_26 : f32 to vector<8x128xf32>
    %54 = arith.maximumf %52, %53 : vector<8x128xf32>
    %c256 = arith.constant 256 : index
    %c0_27 = arith.constant 0 : index
    %55 = vector.load %arg3[%c256, %c0_27] : memref<640x128xbf16, #tpu.memory_space<vmem>>, vector<128x128xbf16>
    %56 = arith.truncf %54 : vector<8x128xf32> to vector<8x128xbf16>
    %cst_28 = arith.constant dense<0.000000e+00> : vector<8x128xf32>
    %57 = tpu.matmul %56, %55, %cst_28 {dimension_numbers = #tpu.dot_dimension_numbers<[1], [0], [0], [1], [0, 0, 1, 1], [], []>} : vector<8x128xbf16>, vector<128x128xbf16>, vector<8x128xf32> -> vector<8x128xf32>
    %c6 = arith.constant 6 : index
    %c0_29 = arith.constant 0 : index
    %58 = vector.load %arg4[%c6, %c0_29] : memref<10x256xf32, #tpu.memory_space<vmem>>, vector<1x256xf32>
    %59 = vector.extract_strided_slice %58 {offsets = [0, 0], sizes = [1, 128], strides = [1, 1]} : vector<1x256xf32> to vector<1x128xf32>
    %60 = vector.broadcast %59 : vector<1x128xf32> to vector<8x128xf32>
    %61 = arith.addf %57, %60 : vector<8x128xf32>
    %62 = arith.addf %61, %45 : vector<8x128xf32>
    %cst_30 = arith.constant 0.000000e+00 : f32
    %63 = vector.broadcast %cst_30 : f32 to vector<8x128xf32>
    %64 = arith.maximumf %62, %63 : vector<8x128xf32>
    %c384 = arith.constant 384 : index
    %c0_31 = arith.constant 0 : index
    %65 = vector.load %arg3[%c384, %c0_31] : memref<640x128xbf16, #tpu.memory_space<vmem>>, vector<128x128xbf16>
    %66 = arith.truncf %64 : vector<8x128xf32> to vector<8x128xbf16>
    %cst_32 = arith.constant dense<0.000000e+00> : vector<8x128xf32>
    %67 = tpu.matmul %66, %65, %cst_32 {dimension_numbers = #tpu.dot_dimension_numbers<[1], [0], [0], [1], [0, 0, 1, 1], [], []>} : vector<8x128xbf16>, vector<128x128xbf16>, vector<8x128xf32> -> vector<8x128xf32>
    %c7 = arith.constant 7 : index
    %c0_33 = arith.constant 0 : index
    %68 = vector.load %arg4[%c7, %c0_33] : memref<10x256xf32, #tpu.memory_space<vmem>>, vector<1x256xf32>
    %69 = vector.extract_strided_slice %68 {offsets = [0, 0], sizes = [1, 128], strides = [1, 1]} : vector<1x256xf32> to vector<1x128xf32>
    %70 = vector.broadcast %69 : vector<1x128xf32> to vector<8x128xf32>
    %71 = arith.addf %67, %70 : vector<8x128xf32>
    %72 = vector.extract_strided_slice %71 {offsets = [0, 0], sizes = [8, 64], strides = [1, 1]} : vector<8x128xf32> to vector<8x64xf32>
    %cst_34 = arith.constant 0.000000e+00 : f32
    %73 = vector.broadcast %cst_34 : f32 to vector<8x64xf32>
    %74 = arith.maximumf %72, %73 : vector<8x64xf32>
    %75 = vector.extract_strided_slice %71 {offsets = [0, 64], sizes = [8, 64], strides = [1, 1]} : vector<8x128xf32> to vector<8x64xf32>
    %c512 = arith.constant 512 : index
    %c0_35 = arith.constant 0 : index
    %76 = vector.load %arg3[%c512, %c0_35] : memref<640x128xbf16, #tpu.memory_space<vmem>>, vector<64x128xbf16>
    %77 = arith.truncf %74 : vector<8x64xf32> to vector<8x64xbf16>
    %cst_36 = arith.constant dense<0.000000e+00> : vector<8x128xf32>
    %78 = tpu.matmul %77, %76, %cst_36 {dimension_numbers = #tpu.dot_dimension_numbers<[1], [0], [0], [1], [0, 0, 1, 1], [], []>} : vector<8x64xbf16>, vector<64x128xbf16>, vector<8x128xf32> -> vector<8x128xf32>
    %79 = vector.extract_strided_slice %78 {offsets = [0, 0], sizes = [8, 64], strides = [1, 1]} : vector<8x128xf32> to vector<8x64xf32>
    %c8 = arith.constant 8 : index
    %c0_37 = arith.constant 0 : index
    %80 = vector.load %arg4[%c8, %c0_37] : memref<10x256xf32, #tpu.memory_space<vmem>>, vector<1x256xf32>
    %81 = vector.extract_strided_slice %80 {offsets = [0, 0], sizes = [1, 64], strides = [1, 1]} : vector<1x256xf32> to vector<1x64xf32>
    %82 = vector.broadcast %81 : vector<1x64xf32> to vector<8x64xf32>
    %83 = arith.addf %79, %82 : vector<8x64xf32>
    %84 = arith.addf %83, %75 : vector<8x64xf32>
    %cst_38 = arith.constant 0.000000e+00 : f32
    %85 = vector.broadcast %cst_38 : f32 to vector<8x64xf32>
    %86 = arith.maximumf %84, %85 : vector<8x64xf32>
    %c576 = arith.constant 576 : index
    %c0_39 = arith.constant 0 : index
    %87 = vector.load %arg3[%c576, %c0_39] : memref<640x128xbf16, #tpu.memory_space<vmem>>, vector<64x128xbf16>
    %88 = arith.truncf %86 : vector<8x64xf32> to vector<8x64xbf16>
    %cst_40 = arith.constant dense<0.000000e+00> : vector<8x128xf32>
    %89 = tpu.matmul %88, %87, %cst_40 {dimension_numbers = #tpu.dot_dimension_numbers<[1], [0], [0], [1], [0, 0, 1, 1], [], []>} : vector<8x64xbf16>, vector<64x128xbf16>, vector<8x128xf32> -> vector<8x128xf32>
    %c9 = arith.constant 9 : index
    %c0_41 = arith.constant 0 : index
    %90 = vector.load %arg4[%c9, %c0_41] : memref<10x256xf32, #tpu.memory_space<vmem>>, vector<1x256xf32>
    %91 = vector.extract_strided_slice %90 {offsets = [0, 0], sizes = [1, 128], strides = [1, 1]} : vector<1x256xf32> to vector<1x128xf32>
    %92 = vector.broadcast %91 : vector<1x128xf32> to vector<8x128xf32>
    %93 = arith.addf %89, %92 : vector<8x128xf32>
    %c0_42 = arith.constant 0 : index
    %c0_43 = arith.constant 0 : index
    %94 = vector.load %arg5[%c0_42, %c0_43] : memref<8x128xf32, #tpu.memory_space<vmem>>, vector<8x128xf32>
    tpu.vector_store %arg5[%c0_42, %c0_43], %93 {strides = array<i32>} : memref<8x128xf32, #tpu.memory_space<vmem>>, vector<8x128xf32>,
    return
  }
  func.func @transform_0(%arg0: i32) -> (i32, i32) {
    %c0_i32 = arith.constant 0 : i32
    %c0_i32_0 = arith.constant 0 : i32
    return %arg0, %c0_i32 : i32, i32
  }
  func.func @transform_1(%arg0: i32) -> (i32, i32) {
    %c0_i32 = arith.constant 0 : i32
    %c0_i32_0 = arith.constant 0 : i32
    %c0_i32_1 = arith.constant 0 : i32
    return %c0_i32, %c0_i32_0 : i32, i32
  }
  func.func @transform_2(%arg0: i32) -> (i32, i32) {
    %c0_i32 = arith.constant 0 : i32
    %c0_i32_0 = arith.constant 0 : i32
    %c0_i32_1 = arith.constant 0 : i32
    return %c0_i32, %c0_i32_0 : i32, i32
  }
  func.func @transform_3(%arg0: i32) -> (i32, i32) {
    %c0_i32 = arith.constant 0 : i32
    %c0_i32_0 = arith.constant 0 : i32
    %c0_i32_1 = arith.constant 0 : i32
    return %c0_i32, %c0_i32_0 : i32, i32
  }
  func.func @transform_4(%arg0: i32) -> (i32, i32) {
    %c0_i32 = arith.constant 0 : i32
    %c0_i32_0 = arith.constant 0 : i32
    return %arg0, %c0_i32 : i32, i32
  }
}

</mosaic_0001>

<llo_original>
// kernel: _forward.1
$region0: #{_forward.1}
  #allocation0 [shape = 'u32[]', space=smem, size = 0x4, offset = 0x4, fixed_abs, tag = 'smem constant byte address 0x4 - core index']
  #allocation1 [shape = 'u32[144,128]{1,0:T(1,128)}', space=vmem, size = 0x12000, scoped, tag = 'internal scratch']
  %s0 = inlined_call_operand.hbm [shape: f32[8,32], index: 0, kind: input, shape index: {}]
  %s1 = inlined_call_operand.hbm [shape: bf16[800,256], index: 1, kind: input, shape index: {}]
  %s2 = inlined_call_operand.hbm [shape: bf16[640,128], index: 2, kind: input, shape index: {}]
  %s3 = inlined_call_operand.hbm [shape: f32[10,256], index: 3, kind: input, shape index: {}]
  %s4 = inlined_call_operand.vmem [shape: f32[8,128], index: 4, kind: output, shape index: {}]
  %s5 = sld [smem:[#allocation0]]
  $region42: #{_forward.1} parent=0
    _
  %s7 = ssub.s32 1, %s5
  %s8 = scalar_select 0, %s7, %s5
  $region1: #{_forward.1} parent=0
    #allocation2 [shape = 'u8[4096]{0}', space=vmem, size = 0x1000, scoped, tag = 'input window, operand 0, single buffered']
    #allocation3 [shape = 's32[1]{0}', space=sflag, size = 0x4, scoped, tag = 'scoped memory for _forward.1']
    #allocation4 [shape = 'u8[409600]{0}', space=vmem, size = 0x64000, scoped, tag = 'input window, operand 1, single buffered']
    #allocation5 [shape = 's32[1]{0}', space=sflag, size = 0x4, scoped, tag = 'scoped memory for _forward.1']
    #allocation6 [shape = 'u8[163840]{0}', space=vmem, size = 0x28000, scoped, tag = 'input window, operand 2, single buffered']
    #allocation7 [shape = 'u8[16384]{0}', space=vmem, size = 0x4000, scoped, tag = 'input window, operand 3, single buffered']
    #allocation8 [shape = 's32[1]{0}', space=sflag, size = 0x4, scoped, tag = 'scoped memory for _forward.1']
    %9 = vsyncpa [#allocation3], 0
    %10 = vsyncpa [#allocation5], 0
    %11 = vsyncpa [#allocation8], 0
    // Predicated region
    $region2: #{_forward.1} parent=1 // pred_check
      _
    $region3: #{_forward.1} parent=1 // pred_check_branch
      %13 = sbr.rel (0) target = $region5
    $region4: #{_forward.1} parent=1 // pred_region
      %s15 = ssub.s32 128, 128
      %16 = vsyncadd [#allocation3], %s15
      %s18 = sshll.u32 [#allocation2], 4
      %s19 = int_to_ptr.vmem [resolvable:$true] %s18
      %21 = dma.hbm_to_vmem [thread:$0]  %s0, 128, %s19, [#allocation3]
    $region5: #{_forward.1} parent=1 // pred_fallthru
      _
    // Predicated region
    $region6: #{_forward.1} parent=1 // pred_check
      _
    $region7: #{_forward.1} parent=1 // pred_check_branch
      %23 = sbr.rel (0) target = $region9
    $region8: #{_forward.1} parent=1 // pred_region
      %s25 = ssub.s32 12800, 12800
      %26 = vsyncadd [#allocation5], %s25
      %s27 = sshll.u32 [#allocation4], 4
      %s28 = int_to_ptr.vmem [resolvable:$true] %s27
      %33 = dma.hbm_to_vmem [thread:$0]  %s1, 12800, %s28, [#allocation5], 128, 128, 8
    $region9: #{_forward.1} parent=1 // pred_fallthru
      _
    // Predicated region
    $region10: #{_forward.1} parent=1 // pred_check
      _
    $region11: #{_forward.1} parent=1 // pred_check_branch
      %35 = sbr.rel (0) target = $region13
    $region12: #{_forward.1} parent=1 // pred_region
      %s37 = ssub.s32 5120, 5120
      %38 = vsyncadd [#allocation5], %s37
      %s39 = sshll.u32 [#allocation6], 4
      %s40 = int_to_ptr.vmem [resolvable:$true] %s39
      %45 = dma.hbm_to_vmem [thread:$0]  %s2, 5120, %s40, [#allocation5], 64, 64, 4
    $region13: #{_forward.1} parent=1 // pred_fallthru
      _
    // Predicated region
    $region14: #{_forward.1} parent=1 // pred_check
      _
    $region15: #{_forward.1} parent=1 // pred_check_branch
      %47 = sbr.rel (0) target = $region17
    $region16: #{_forward.1} parent=1 // pred_region
      %s49 = ssub.s32 512, 512
      %50 = vsyncadd [#allocation8], %s49
      %s51 = sshll.u32 [#allocation7], 4
      %s52 = int_to_ptr.vmem [resolvable:$true] %s51
      %57 = dma.hbm_to_vmem [thread:$0]  %s3, 512, %s52, [#allocation8], 256, 256, 16
    $region17: #{_forward.1} parent=1 // pred_fallthru
      _
    // Predicated region
    $region18: #{_forward.1} parent=1 // pred_check
      _
    $region19: #{_forward.1} parent=1 // pred_check_branch
      %59 = sbr.rel (0) target = $region21
    $region20: #{_forward.1} parent=1 // pred_region
      %60 = dma.done [#allocation3], 128
    $region21: #{_forward.1} parent=1 // pred_fallthru
      _
    // Predicated region
    $region22: #{_forward.1} parent=1 // pred_check
      _
    $region23: #{_forward.1} parent=1 // pred_check_branch
      %62 = sbr.rel (0) target = $region25
    $region24: #{_forward.1} parent=1 // pred_region
      %63 = dma.done [#allocation5], 12800
    $region25: #{_forward.1} parent=1 // pred_fallthru
      _
    // Predicated region
    $region26: #{_forward.1} parent=1 // pred_check
      _
    $region27: #{_forward.1} parent=1 // pred_check_branch
      %65 = sbr.rel (0) target = $region29
    $region28: #{_forward.1} parent=1 // pred_region
      %66 = dma.done [#allocation5], 5120
    $region29: #{_forward.1} parent=1 // pred_fallthru
      _
    // Predicated region
    $region30: #{_forward.1} parent=1 // pred_check
      _
    $region31: #{_forward.1} parent=1 // pred_check_branch
      %68 = sbr.rel (0) target = $region33
    $region32: #{_forward.1} parent=1 // pred_region
      %69 = dma.done [#allocation8], 512
    $region33: #{_forward.1} parent=1 // pred_fallthru
      _
    %v71 = vld [vmem:[#allocation2] sm:$0xff]
    %v72 = vld [vmem:[#allocation4] sm:$0xff]
    %v73 = vld [vmem:[#allocation4 + $0x8] sm:$0xff]
    %v74 = vld [vmem:[#allocation4 + $0x10] sm:$0xff]
    %v75 = vld [vmem:[#allocation4 + $0x18] sm:$0xff]
    %v76 = vpack.c.bf16 %v71, %v71
    %v77 = vld [vmem:[#allocation7] ss:$8 sm:$0x3]
    %v79 = vlaneseq
    %v80 = vshrl.u32 %v79, 7
    %v81 = vsub.s32 0, %v80
    %v82 = vrot.slane %v77, %v81
    %v83 = vlaneseq
    %v84 = vshrl.u32 %v83, 7
    %v85 = vsub.s32 1, %v84
    %v86 = vrot.slane %v77, %v85
    %v93 = vunpack.c.l.b16 %v72
    %v94 = vunpack.c.h.b16 %v72
    %v95 = vunpack.c.l.b16 %v73
    %v96 = vunpack.c.h.b16 %v73
    %v97 = vunpack.c.l.b16 %v74
    %v98 = vunpack.c.h.b16 %v74
    %v99 = vunpack.c.l.b16 %v75
    %v100 = vunpack.c.h.b16 %v75
    %v101 = vpack.c.b16 %v95, %v93
    %v102 = vpack.c.b16 %v96, %v94
    %v103 = vpack.c.b16 %v99, %v97
    %v104 = vpack.c.b16 %v100, %v98
    %vm109 = vcmask 261120
    %v111 = vsel %vm109, %v76, 0
    %113 = vmatprep.subr.bf16.mxu0 %v102
    %114 = vmatpush1.bf16.msra.mxu0 %v101
    %115 = vmatprep.subr.bf16.mxu0 %v104
    %116 = vmatpush1.bf16.msra.mxu0 %v103
    %117 = vmatprep.subr.bf16.mxu0 0
    %118 = vmatpush1.bf16.msra.mxu0 0
    %119 = vmatprep.subr.bf16.mxu0 0
    %120 = vmatpush1.bf16.msra.mxu0 0
    %121 = vmatprep.subr.bf16.mxu0 0
    %122 = vmatpush1.bf16.msra.mxu0 0
    %123 = vmatprep.subr.bf16.mxu0 0
    %124 = vmatpush1.bf16.msra.mxu0 0
    %125 = vmatprep.subr.bf16.mxu0 0
    %126 = vmatpush1.bf16.msra.mxu0 0
    %127 = vmatprep.subr.bf16.mxu0 0
    %128 = vmatpush1.bf16.msra.mxu0 0
    %129 = vmatprep.subr.bf16.mxu0 0
    %130 = vmatpush1.bf16.msra.mxu0 0
    %131 = vmatprep.subr.bf16.mxu0 0
    %132 = vmatpush1.bf16.msra.mxu0 0
    %133 = vmatprep.subr.bf16.mxu0 0
    %134 = vmatpush1.bf16.msra.mxu0 0
    %135 = vmatprep.subr.bf16.mxu0 0
    %136 = vmatpush1.bf16.msra.mxu0 0
    %137 = vmatprep.subr.bf16.mxu0 0
    %138 = vmatpush1.bf16.msra.mxu0 0
    %139 = vmatprep.subr.bf16.mxu0 0
    %140 = vmatpush1.bf16.msra.mxu0 0
    %141 = vmatprep.subr.bf16.mxu0 0
    %142 = vmatpush1.bf16.msra.mxu0 0
    %143 = vmatprep.subr.bf16.mxu0 0
    %144 = vmatpush1.bf16.msra.mxu0 0
    %145 = vmatprep.mubr.bf16.mxu0 0
    %146 = vmatmul.mubr.bf16.gmra.mrb[0].mxu0 %v111
    %v147 = vpop.f32.mrb[0].mxu0
    %v148 = vadd.f32 %v82, %v147
    %v149 = vpop.f32.mrb[0].mxu0
    %v150 = vadd.f32 %v86, %v149
    %v151 = vpop.f32.mrb[0].mxu0
    %v152 = vpop.f32.mrb[0].mxu0
    %153 = vdwg.mxu0
    %v154 = vmax.f32 %v148, 0.0
    %v155 = vmax.f32 %v150, 0.0
    %v156 = vld [vmem:[#allocation4 + $0x20] sm:$0xff]
    %v157 = vld [vmem:[#allocation4 + $0x28] sm:$0xff]
    %v158 = vld [vmem:[#allocation4 + $0x30] sm:$0xff]
    %v159 = vld [vmem:[#allocation4 + $0x38] sm:$0xff]
    %v160 = vld [vmem:[#allocation4 + $0x40] sm:$0xff]
    %v161 = vld [vmem:[#allocation4 + $0x48] sm:$0xff]
    %v162 = vld [vmem:[#allocation4 + $0x50] sm:$0xff]
    %v163 = vld [vmem:[#allocation4 + $0x58] sm:$0xff]
    %v164 = vld [vmem:[#allocation4 + $0x60] sm:$0xff]
    %v165 = vld [vmem:[#allocation4 + $0x68] sm:$0xff]
    %v166 = vld [vmem:[#allocation4 + $0x70] sm:$0xff]
    %v167 = vld [vmem:[#allocation4 + $0x78] sm:$0xff]
    %v168 = vld [vmem:[#allocation4 + $0x80] sm:$0xff]
    %v169 = vld [vmem:[#allocation4 + $0x88] sm:$0xff]
    %v170 = vld [vmem:[#allocation4 + $0x90] sm:$0xff]
    %v171 = vld [vmem:[#allocation4 + $0x98] sm:$0xff]
    %v172 = vld [vmem:[#allocation4 + $0xa0] sm:$0xff]
    %v173 = vld [vmem:[#allocation4 + $0xa8] sm:$0xff]
    %v174 = vld [vmem:[#allocation4 + $0xb0] sm:$0xff]
    %v175 = vld [vmem:[#allocation4 + $0xb8] sm:$0xff]
    %v176 = vld [vmem:[#allocation4 + $0xc0] sm:$0xff]
    %v177 = vld [vmem:[#allocation4 + $0xc8] sm:$0xff]
    %v178 = vld [vmem:[#allocation4 + $0xd0] sm:$0xff]
    %v179 = vld [vmem:[#allocation4 + $0xd8] sm:$0xff]
    %v180 = vld [vmem:[#allocation4 + $0xe0] sm:$0xff]
    %v181 = vld [vmem:[#allocation4 + $0xe8] sm:$0xff]
    %v182 = vld [vmem:[#allocation4 + $0xf0] sm:$0xff]
    %v183 = vld [vmem:[#allocation4 + $0xf8] sm:$0xff]
    %v184 = vld [vmem:[#allocation4 + $0x100] sm:$0xff]
    %v185 = vld [vmem:[#allocation4 + $0x108] sm:$0xff]
    %v186 = vld [vmem:[#allocation4 + $0x110] sm:$0xff]
    %v187 = vld [vmem:[#allocation4 + $0x118] sm:$0xff]
    %v188 = vpack.c.bf16 %v154, %v154
    %v189 = vpack.c.bf16 %v155, %v155
    %s190 = scalar_lea.vmem [#allocation7], 1
    %v191 = vld [vmem:[%s190] ss:$8 sm:$0x3]
    %v193 = vlaneseq
    %v194 = vshrl.u32 %v193, 7
    %v195 = vsub.s32 0, %v194
    %v196 = vrot.slane %v191, %v195
    %v197 = vlaneseq
    %v198 = vshrl.u32 %v197, 7
    %v199 = vsub.s32 1, %v198
    %v200 = vrot.slane %v191, %v199
    %v235 = vunpack.c.l.b16 %v156
    %v236 = vunpack.c.h.b16 %v156
    %v237 = vunpack.c.l.b16 %v157
    %v238 = vunpack.c.h.b16 %v157
    %v239 = vunpack.c.l.b16 %v158
    %v240 = vunpack.c.h.b16 %v158
    %v241 = vunpack.c.l.b16 %v159
    %v242 = vunpack.c.h.b16 %v159
    %v243 = vunpack.c.l.b16 %v160
    %v244 = vunpack.c.h.b16 %v160
    %v245 = vunpack.c.l.b16 %v161
    %v246 = vunpack.c.h.b16 %v161
    %v247 = vunpack.c.l.b16 %v162
    %v248 = vunpack.c.h.b16 %v162
    %v249 = vunpack.c.l.b16 %v163
    %v250 = vunpack.c.h.b16 %v163
    %v251 = vunpack.c.l.b16 %v164
    %v252 = vunpack.c.h.b16 %v164
    %v253 = vunpack.c.l.b16 %v165
    %v254 = vunpack.c.h.b16 %v165
    %v255 = vunpack.c.l.b16 %v166
    %v256 = vunpack.c.h.b16 %v166
    %v257 = vunpack.c.l.b16 %v167
    %v258 = vunpack.c.h.b16 %v167
    %v259 = vunpack.c.l.b16 %v168
    %v260 = vunpack.c.h.b16 %v168
    %v261 = vunpack.c.l.b16 %v169
    %v262 = vunpack.c.h.b16 %v169
    %v263 = vunpack.c.l.b16 %v170
    %v264 = vunpack.c.h.b16 %v170
    %v265 = vunpack.c.l.b16 %v171
    %v266 = vunpack.c.h.b16 %v171
    %v267 = vunpack.c.l.b16 %v172
    %v268 = vunpack.c.h.b16 %v172
    %v269 = vunpack.c.l.b16 %v173
    %v270 = vunpack.c.h.b16 %v173
    %v271 = vunpack.c.l.b16 %v174
    %v272 = vunpack.c.h.b16 %v174
    %v273 = vunpack.c.l.b16 %v175
    %v274 = vunpack.c.h.b16 %v175
    %v275 = vunpack.c.l.b16 %v176
    %v276 = vunpack.c.h.b16 %v176
    %v277 = vunpack.c.l.b16 %v177
    %v278 = vunpack.c.h.b16 %v177
    %v279 = vunpack.c.l.b16 %v178
    %v280 = vunpack.c.h.b16 %v178
    %v281 = vunpack.c.l.b16 %v179
    %v282 = vunpack.c.h.b16 %v179
    %v283 = vunpack.c.l.b16 %v180
    %v284 = vunpack.c.h.b16 %v180
    %v285 = vunpack.c.l.b16 %v181
    %v286 = vunpack.c.h.b16 %v181
    %v287 = vunpack.c.l.b16 %v182
    %v288 = vunpack.c.h.b16 %v182
    %v289 = vunpack.c.l.b16 %v183
    %v290 = vunpack.c.h.b16 %v183
    %v291 = vunpack.c.l.b16 %v184
    %v292 = vunpack.c.h.b16 %v184
    %v293 = vunpack.c.l.b16 %v185
    %v294 = vunpack.c.h.b16 %v185
    %v295 = vunpack.c.l.b16 %v186
    %v296 = vunpack.c.h.b16 %v186
    %v297 = vunpack.c.l.b16 %v187
    %v298 = vunpack.c.h.b16 %v187
    %v299 = vpack.c.b16 %v237, %v235
    %v300 = vpack.c.b16 %v238, %v236
    %v301 = vpack.c.b16 %v241, %v239
    %v302 = vpack.c.b16 %v242, %v240
    %v303 = vpack.c.b16 %v245, %v243
    %v304 = vpack.c.b16 %v246, %v244
    %v305 = vpack.c.b16 %v249, %v247
    %v306 = vpack.c.b16 %v250, %v248
    %v307 = vpack.c.b16 %v253, %v251
    %v308 = vpack.c.b16 %v254, %v252
    %v309 = vpack.c.b16 %v257, %v255
    %v310 = vpack.c.b16 %v258, %v256
    %v311 = vpack.c.b16 %v261, %v259
    %v312 = vpack.c.b16 %v262, %v260
    %v313 = vpack.c.b16 %v265, %v263
    %v314 = vpack.c.b16 %v266, %v264
    %v315 = vpack.c.b16 %v269, %v267
    %v316 = vpack.c.b16 %v270, %v268
    %v317 = vpack.c.b16 %v273, %v271
    %v318 = vpack.c.b16 %v274, %v272
    %v319 = vpack.c.b16 %v277, %v275
    %v320 = vpack.c.b16 %v278, %v276
    %v321 = vpack.c.b16 %v281, %v279
    %v322 = vpack.c.b16 %v282, %v280
    %v323 = vpack.c.b16 %v285, %v283
    %v324 = vpack.c.b16 %v286, %v284
    %v325 = vpack.c.b16 %v289, %v287
    %v326 = vpack.c.b16 %v290, %v288
    %v327 = vpack.c.b16 %v293, %v291
    %v328 = vpack.c.b16 %v294, %v292
    %v329 = vpack.c.b16 %v297, %v295
    %v330 = vpack.c.b16 %v298, %v296
    %363 = vmatprep.subr.bf16.mxu0 %v300
    %364 = vmatpush1.bf16.msra.mxu0 %v299
    %365 = vmatprep.subr.bf16.mxu0 %v302
    %366 = vmatpush1.bf16.msra.mxu0 %v301
    %367 = vmatprep.subr.bf16.mxu0 %v304
    %368 = vmatpush1.bf16.msra.mxu0 %v303
    %369 = vmatprep.subr.bf16.mxu0 %v306
    %370 = vmatpush1.bf16.msra.mxu0 %v305
    %371 = vmatprep.subr.bf16.mxu0 %v308
    %372 = vmatpush1.bf16.msra.mxu0 %v307
    %373 = vmatprep.subr.bf16.mxu0 %v310
    %374 = vmatpush1.bf16.msra.mxu0 %v309
    %375 = vmatprep.subr.bf16.mxu0 %v312
    %376 = vmatpush1.bf16.msra.mxu0 %v311
    %377 = vmatprep.subr.bf16.mxu0 %v314
    %378 = vmatpush1.bf16.msra.mxu0 %v313
    %379 = vmatprep.subr.bf16.mxu0 %v316
    %380 = vmatpush1.bf16.msra.mxu0 %v315
    %381 = vmatprep.subr.bf16.mxu0 %v318
    %382 = vmatpush1.bf16.msra.mxu0 %v317
    %383 = vmatprep.subr.bf16.mxu0 %v320
    %384 = vmatpush1.bf16.msra.mxu0 %v319
    %385 = vmatprep.subr.bf16.mxu0 %v322
    %386 = vmatpush1.bf16.msra.mxu0 %v321
    %387 = vmatprep.subr.bf16.mxu0 %v324
    %388 = vmatpush1.bf16.msra.mxu0 %v323
    %389 = vmatprep.subr.bf16.mxu0 %v326
    %390 = vmatpush1.bf16.msra.mxu0 %v325
    %391 = vmatprep.subr.bf16.mxu0 %v328
    %392 = vmatpush1.bf16.msra.mxu0 %v327
    %393 = vmatprep.subr.bf16.mxu0 %v330
    %394 = vmatpush1.bf16.msra.mxu0 %v329
    %395 = vmatprep.mubr.bf16.mxu0 %v189
    %396 = vmatmul.mubr.bf16.gmra.mrb[0].mxu0 %v188
    %v397 = vpop.f32.mrb[0].mxu0
    %v398 = vadd.f32 %v196, %v397
    %v399 = vpop.f32.mrb[0].mxu0
    %v400 = vadd.f32 %v200, %v399
    %v401 = vpop.f32.mrb[0].mxu0
    %v402 = vpop.f32.mrb[0].mxu0
    %403 = vdwg.mxu0
    %v404 = vmax.f32 %v398, 0.0
    %v405 = vmax.f32 %v400, 0.0
    %v406 = vld [vmem:[#allocation4 + $0x120] sm:$0xff]
    %v407 = vld [vmem:[#allocation4 + $0x128] sm:$0xff]
    %v408 = vld [vmem:[#allocation4 + $0x130] sm:$0xff]
    %v409 = vld [vmem:[#allocation4 + $0x138] sm:$0xff]
    %v410 = vld [vmem:[#allocation4 + $0x140] sm:$0xff]
    %v411 = vld [vmem:[#allocation4 + $0x148] sm:$0xff]
    %v412 = vld [vmem:[#allocation4 + $0x150] sm:$0xff]
    %v413 = vld [vmem:[#allocation4 + $0x158] sm:$0xff]
    %v414 = vld [vmem:[#allocation4 + $0x160] sm:$0xff]
    %v415 = vld [vmem:[#allocation4 + $0x168] sm:$0xff]
    %v416 = vld [vmem:[#allocation4 + $0x170] sm:$0xff]
    %v417 = vld [vmem:[#allocation4 + $0x178] sm:$0xff]
    %v418 = vld [vmem:[#allocation4 + $0x180] sm:$0xff]
    %v419 = vld [vmem:[#allocation4 + $0x188] sm:$0xff]
    %v420 = vld [vmem:[#allocation4 + $0x190] sm:$0xff]
    %v421 = vld [vmem:[#allocation4 + $0x198] sm:$0xff]
    %v422 = vld [vmem:[#allocation4 + $0x1a0] sm:$0xff]
    %v423 = vld [vmem:[#allocation4 + $0x1a8] sm:$0xff]
    %v424 = vld [vmem:[#allocation4 + $0x1b0] sm:$0xff]
    %v425 = vld [vmem:[#allocation4 + $0x1b8] sm:$0xff]
    %v426 = vld [vmem:[#allocation4 + $0x1c0] sm:$0xff]
    %v427 = vld [vmem:[#allocation4 + $0x1c8] sm:$0xff]
    %v428 = vld [vmem:[#allocation4 + $0x1d0] sm:$0xff]
    %v429 = vld [vmem:[#allocation4 + $0x1d8] sm:$0xff]
    %v430 = vld [vmem:[#allocation4 + $0x1e0] sm:$0xff]
    %v431 = vld [vmem:[#allocation4 + $0x1e8] sm:$0xff]
    %v432 = vld [vmem:[#allocation4 + $0x1f0] sm:$0xff]
    %v433 = vld [vmem:[#allocation4 + $0x1f8] sm:$0xff]
    %v434 = vld [vmem:[#allocation4 + $0x200] sm:$0xff]
    %v435 = vld [vmem:[#allocation4 + $0x208] sm:$0xff]
    %v436 = vld [vmem:[#allocation4 + $0x210] sm:$0xff]
    %v437 = vld [vmem:[#allocation4 + $0x218] sm:$0xff]
    %v438 = vpack.c.bf16 %v404, %v404
    %v439 = vpack.c.bf16 %v405, %v405
    %s440 = scalar_lea.vmem [#allocation7], 2
    %v441 = vld [vmem:[%s440] ss:$8 sm:$0x3]
    %v443 = vlaneseq
    %v444 = vshrl.u32 %v443, 7
    %v445 = vsub.s32 0, %v444
    %v446 = vrot.slane %v441, %v445
    %v447 = vlaneseq
    %v448 = vshrl.u32 %v447, 7
    %v449 = vsub.s32 1, %v448
    %v450 = vrot.slane %v441, %v449
    %v485 = vunpack.c.l.b16 %v406
    %v486 = vunpack.c.h.b16 %v406
    %v487 = vunpack.c.l.b16 %v407
    %v488 = vunpack.c.h.b16 %v407
    %v489 = vunpack.c.l.b16 %v408
    %v490 = vunpack.c.h.b16 %v408
    %v491 = vunpack.c.l.b16 %v409
    %v492 = vunpack.c.h.b16 %v409
    %v493 = vunpack.c.l.b16 %v410
    %v494 = vunpack.c.h.b16 %v410
    %v495 = vunpack.c.l.b16 %v411
    %v496 = vunpack.c.h.b16 %v411
    %v497 = vunpack.c.l.b16 %v412
    %v498 = vunpack.c.h.b16 %v412
    %v499 = vunpack.c.l.b16 %v413
    %v500 = vunpack.c.h.b16 %v413
    %v501 = vunpack.c.l.b16 %v414
    %v502 = vunpack.c.h.b16 %v414
    %v503 = vunpack.c.l.b16 %v415
    %v504 = vunpack.c.h.b16 %v415
    %v505 = vunpack.c.l.b16 %v416
    %v506 = vunpack.c.h.b16 %v416
    %v507 = vunpack.c.l.b16 %v417
    %v508 = vunpack.c.h.b16 %v417
    %v509 = vunpack.c.l.b16 %v418
    %v510 = vunpack.c.h.b16 %v418
    %v511 = vunpack.c.l.b16 %v419
    %v512 = vunpack.c.h.b16 %v419
    %v513 = vunpack.c.l.b16 %v420
    %v514 = vunpack.c.h.b16 %v420
    %v515 = vunpack.c.l.b16 %v421
    %v516 = vunpack.c.h.b16 %v421
    %v517 = vunpack.c.l.b16 %v422
    %v518 = vunpack.c.h.b16 %v422
    %v519 = vunpack.c.l.b16 %v423
    %v520 = vunpack.c.h.b16 %v423
    %v521 = vunpack.c.l.b16 %v424
    %v522 = vunpack.c.h.b16 %v424
    %v523 = vunpack.c.l.b16 %v425
    %v524 = vunpack.c.h.b16 %v425
    %v525 = vunpack.c.l.b16 %v426
    %v526 = vunpack.c.h.b16 %v426
    %v527 = vunpack.c.l.b16 %v427
    %v528 = vunpack.c.h.b16 %v427
    %v529 = vunpack.c.l.b16 %v428
    %v530 = vunpack.c.h.b16 %v428
    %v531 = vunpack.c.l.b16 %v429
    %v532 = vunpack.c.h.b16 %v429
    %v533 = vunpack.c.l.b16 %v430
    %v534 = vunpack.c.h.b16 %v430
    %v535 = vunpack.c.l.b16 %v431
    %v536 = vunpack.c.h.b16 %v431
    %v537 = vunpack.c.l.b16 %v432
    %v538 = vunpack.c.h.b16 %v432
    %v539 = vunpack.c.l.b16 %v433
    %v540 = vunpack.c.h.b16 %v433
    %v541 = vunpack.c.l.b16 %v434
    %v542 = vunpack.c.h.b16 %v434
    %v543 = vunpack.c.l.b16 %v435
    %v544 = vunpack.c.h.b16 %v435
    %v545 = vunpack.c.l.b16 %v436
    %v546 = vunpack.c.h.b16 %v436
    %v547 = vunpack.c.l.b16 %v437
    %v548 = vunpack.c.h.b16 %v437
    %v549 = vpack.c.b16 %v487, %v485
    %v550 = vpack.c.b16 %v488, %v486
    %v551 = vpack.c.b16 %v491, %v489
    %v552 = vpack.c.b16 %v492, %v490
    %v553 = vpack.c.b16 %v495, %v493
    %v554 = vpack.c.b16 %v496, %v494
    %v555 = vpack.c.b16 %v499, %v497
    %v556 = vpack.c.b16 %v500, %v498
    %v557 = vpack.c.b16 %v503, %v501
    %v558 = vpack.c.b16 %v504, %v502
    %v559 = vpack.c.b16 %v507, %v505
    %v560 = vpack.c.b16 %v508, %v506
    %v561 = vpack.c.b16 %v511, %v509
    %v562 = vpack.c.b16 %v512, %v510
    %v563 = vpack.c.b16 %v515, %v513
    %v564 = vpack.c.b16 %v516, %v514
    %v565 = vpack.c.b16 %v519, %v517
    %v566 = vpack.c.b16 %v520, %v518
    %v567 = vpack.c.b16 %v523, %v521
    %v568 = vpack.c.b16 %v524, %v522
    %v569 = vpack.c.b16 %v527, %v525
    %v570 = vpack.c.b16 %v528, %v526
    %v571 = vpack.c.b16 %v531, %v529
    %v572 = vpack.c.b16 %v532, %v530
    %v573 = vpack.c.b16 %v535, %v533
    %v574 = vpack.c.b16 %v536, %v534
    %v575 = vpack.c.b16 %v539, %v537
    %v576 = vpack.c.b16 %v540, %v538
    %v577 = vpack.c.b16 %v543, %v541
    %v578 = vpack.c.b16 %v544, %v542
    %v579 = vpack.c.b16 %v547, %v545
    %v580 = vpack.c.b16 %v548, %v546
    %613 = vmatprep.subr.bf16.mxu0 %v550
    %614 = vmatpush1.bf16.msra.mxu0 %v549
    %615 = vmatprep.subr.bf16.mxu0 %v552
    %616 = vmatpush1.bf16.msra.mxu0 %v551
    %617 = vmatprep.subr.bf16.mxu0 %v554
    %618 = vmatpush1.bf16.msra.mxu0 %v553
    %619 = vmatprep.subr.bf16.mxu0 %v556
    %620 = vmatpush1.bf16.msra.mxu0 %v555
    %621 = vmatprep.subr.bf16.mxu0 %v558
    %622 = vmatpush1.bf16.msra.mxu0 %v557
    %623 = vmatprep.subr.bf16.mxu0 %v560
    %624 = vmatpush1.bf16.msra.mxu0 %v559
    %625 = vmatprep.subr.bf16.mxu0 %v562
    %626 = vmatpush1.bf16.msra.mxu0 %v561
    %627 = vmatprep.subr.bf16.mxu0 %v564
    %628 = vmatpush1.bf16.msra.mxu0 %v563
    %629 = vmatprep.subr.bf16.mxu0 %v566
    %630 = vmatpush1.bf16.msra.mxu0 %v565
    %631 = vmatprep.subr.bf16.mxu0 %v568
    %632 = vmatpush1.bf16.msra.mxu0 %v567
    %633 = vmatprep.subr.bf16.mxu0 %v570
    %634 = vmatpush1.bf16.msra.mxu0 %v569
    %635 = vmatprep.subr.bf16.mxu0 %v572
    %636 = vmatpush1.bf16.msra.mxu0 %v571
    %637 = vmatprep.subr.bf16.mxu0 %v574
    %638 = vmatpush1.bf16.msra.mxu0 %v573
    %639 = vmatprep.subr.bf16.mxu0 %v576
    %640 = vmatpush1.bf16.msra.mxu0 %v575
    %641 = vmatprep.subr.bf16.mxu0 %v578
    %642 = vmatpush1.bf16.msra.mxu0 %v577
    %643 = vmatprep.subr.bf16.mxu0 %v580
    %644 = vmatpush1.bf16.msra.mxu0 %v579
    %645 = vmatprep.mubr.bf16.mxu0 %v439
    %646 = vmatmul.mubr.bf16.gmra.mrb[0].mxu0 %v438
    %v647 = vpop.f32.mrb[0].mxu0
    %v648 = vadd.f32 %v446, %v647
    %v649 = vpop.f32.mrb[0].mxu0
    %v650 = vadd.f32 %v450, %v649
    %v651 = vpop.f32.mrb[0].mxu0
    %v652 = vpop.f32.mrb[0].mxu0
    %653 = vdwg.mxu0
    %v654 = vadd.f32 %v648, %v154
    %v655 = vadd.f32 %v650, %v155
    %v656 = vmax.f32 %v654, 0.0
    %v657 = vmax.f32 %v655, 0.0
    %v658 = vld [vmem:[#allocation4 + $0x220] sm:$0xff]
    %v659 = vld [vmem:[#allocation4 + $0x228] sm:$0xff]
    %v660 = vld [vmem:[#allocation4 + $0x230] sm:$0xff]
    %v661 = vld [vmem:[#allocation4 + $0x238] sm:$0xff]
    %v662 = vld [vmem:[#allocation4 + $0x240] sm:$0xff]
    %v663 = vld [vmem:[#allocation4 + $0x248] sm:$0xff]
    %v664 = vld [vmem:[#allocation4 + $0x250] sm:$0xff]
    %v665 = vld [vmem:[#allocation4 + $0x258] sm:$0xff]
    %v666 = vld [vmem:[#allocation4 + $0x260] sm:$0xff]
    %v667 = vld [vmem:[#allocation4 + $0x268] sm:$0xff]
    %v668 = vld [vmem:[#allocation4 + $0x270] sm:$0xff]
    %v669 = vld [vmem:[#allocation4 + $0x278] sm:$0xff]
    %v670 = vld [vmem:[#allocation4 + $0x280] sm:$0xff]
    %v671 = vld [vmem:[#allocation4 + $0x288] sm:$0xff]
    %v672 = vld [vmem:[#allocation4 + $0x290] sm:$0xff]
    %v673 = vld [vmem:[#allocation4 + $0x298] sm:$0xff]
    %v674 = vld [vmem:[#allocation4 + $0x2a0] sm:$0xff]
    %v675 = vld [vmem:[#allocation4 + $0x2a8] sm:$0xff]
    %v676 = vld [vmem:[#allocation4 + $0x2b0] sm:$0xff]
    %v677 = vld [vmem:[#allocation4 + $0x2b8] sm:$0xff]
    %v678 = vld [vmem:[#allocation4 + $0x2c0] sm:$0xff]
    %v679 = vld [vmem:[#allocation4 + $0x2c8] sm:$0xff]
    %v680 = vld [vmem:[#allocation4 + $0x2d0] sm:$0xff]
    %v681 = vld [vmem:[#allocation4 + $0x2d8] sm:$0xff]
    %v682 = vld [vmem:[#allocation4 + $0x2e0] sm:$0xff]
    %v683 = vld [vmem:[#allocation4 + $0x2e8] sm:$0xff]
    %v684 = vld [vmem:[#allocation4 + $0x2f0] sm:$0xff]
    %v685 = vld [vmem:[#allocation4 + $0x2f8] sm:$0xff]
    %v686 = vld [vmem:[#allocation4 + $0x300] sm:$0xff]
    %v687 = vld [vmem:[#allocation4 + $0x308] sm:$0xff]
    %v688 = vld [vmem:[#allocation4 + $0x310] sm:$0xff]
    %v689 = vld [vmem:[#allocation4 + $0x318] sm:$0xff]
    %v690 = vpack.c.bf16 %v656, %v656
    %v691 = vpack.c.bf16 %v657, %v657
    %s692 = scalar_lea.vmem [#allocation7], 3
    %v693 = vld [vmem:[%s692] ss:$8 sm:$0x3]
    %v695 = vlaneseq
    %v696 = vshrl.u32 %v695, 7
    %v697 = vsub.s32 0, %v696
    %v698 = vrot.slane %v693, %v697
    %v699 = vlaneseq
    %v700 = vshrl.u32 %v699, 7
    %v701 = vsub.s32 1, %v700
    %v702 = vrot.slane %v693, %v701
    %v737 = vunpack.c.l.b16 %v658
    %v738 = vunpack.c.h.b16 %v658
    %v739 = vunpack.c.l.b16 %v659
    %v740 = vunpack.c.h.b16 %v659
    %v741 = vunpack.c.l.b16 %v660
    %v742 = vunpack.c.h.b16 %v660
    %v743 = vunpack.c.l.b16 %v661
    %v744 = vunpack.c.h.b16 %v661
    %v745 = vunpack.c.l.b16 %v662
    %v746 = vunpack.c.h.b16 %v662
    %v747 = vunpack.c.l.b16 %v663
    %v748 = vunpack.c.h.b16 %v663
    %v749 = vunpack.c.l.b16 %v664
    %v750 = vunpack.c.h.b16 %v664
    %v751 = vunpack.c.l.b16 %v665
    %v752 = vunpack.c.h.b16 %v665
    %v753 = vunpack.c.l.b16 %v666
    %v754 = vunpack.c.h.b16 %v666
    %v755 = vunpack.c.l.b16 %v667
    %v756 = vunpack.c.h.b16 %v667
    %v757 = vunpack.c.l.b16 %v668
    %v758 = vunpack.c.h.b16 %v668
    %v759 = vunpack.c.l.b16 %v669
    %v760 = vunpack.c.h.b16 %v669
    %v761 = vunpack.c.l.b16 %v670
    %v762 = vunpack.c.h.b16 %v670
    %v763 = vunpack.c.l.b16 %v671
    %v764 = vunpack.c.h.b16 %v671
    %v765 = vunpack.c.l.b16 %v672
    %v766 = vunpack.c.h.b16 %v672
    %v767 = vunpack.c.l.b16 %v673
    %v768 = vunpack.c.h.b16 %v673
    %v769 = vunpack.c.l.b16 %v674
    %v770 = vunpack.c.h.b16 %v674
    %v771 = vunpack.c.l.b16 %v675
    %v772 = vunpack.c.h.b16 %v675
    %v773 = vunpack.c.l.b16 %v676
    %v774 = vunpack.c.h.b16 %v676
    %v775 = vunpack.c.l.b16 %v677
    %v776 = vunpack.c.h.b16 %v677
    %v777 = vunpack.c.l.b16 %v678
    %v778 = vunpack.c.h.b16 %v678
    %v779 = vunpack.c.l.b16 %v679
    %v780 = vunpack.c.h.b16 %v679
    %v781 = vunpack.c.l.b16 %v680
    %v782 = vunpack.c.h.b16 %v680
    %v783 = vunpack.c.l.b16 %v681
    %v784 = vunpack.c.h.b16 %v681
    %v785 = vunpack.c.l.b16 %v682
    %v786 = vunpack.c.h.b16 %v682
    %v787 = vunpack.c.l.b16 %v683
    %v788 = vunpack.c.h.b16 %v683
    %v789 = vunpack.c.l.b16 %v684
    %v790 = vunpack.c.h.b16 %v684
    %v791 = vunpack.c.l.b16 %v685
    %v792 = vunpack.c.h.b16 %v685
    %v793 = vunpack.c.l.b16 %v686
    %v794 = vunpack.c.h.b16 %v686
    %v795 = vunpack.c.l.b16 %v687
    %v796 = vunpack.c.h.b16 %v687
    %v797 = vunpack.c.l.b16 %v688
    %v798 = vunpack.c.h.b16 %v688
    %v799 = vunpack.c.l.b16 %v689
    %v800 = vunpack.c.h.b16 %v689
    %v801 = vpack.c.b16 %v739, %v737
    %v802 = vpack.c.b16 %v740, %v738
    %v803 = vpack.c.b16 %v743, %v741
    %v804 = vpack.c.b16 %v744, %v742
    %v805 = vpack.c.b16 %v747, %v745
    %v806 = vpack.c.b16 %v748, %v746
    %v807 = vpack.c.b16 %v751, %v749
    %v808 = vpack.c.b16 %v752, %v750
    %v809 = vpack.c.b16 %v755, %v753
    %v810 = vpack.c.b16 %v756, %v754
    %v811 = vpack.c.b16 %v759, %v757
    %v812 = vpack.c.b16 %v760, %v758
    %v813 = vpack.c.b16 %v763, %v761
    %v814 = vpack.c.b16 %v764, %v762
    %v815 = vpack.c.b16 %v767, %v765
    %v816 = vpack.c.b16 %v768, %v766
    %v817 = vpack.c.b16 %v771, %v769
    %v818 = vpack.c.b16 %v772, %v770
    %v819 = vpack.c.b16 %v775, %v773
    %v820 = vpack.c.b16 %v776, %v774
    %v821 = vpack.c.b16 %v779, %v777
    %v822 = vpack.c.b16 %v780, %v778
    %v823 = vpack.c.b16 %v783, %v781
    %v824 = vpack.c.b16 %v784, %v782
    %v825 = vpack.c.b16 %v787, %v785
    %v826 = vpack.c.b16 %v788, %v786
    %v827 = vpack.c.b16 %v791, %v789
    %v828 = vpack.c.b16 %v792, %v790
    %v829 = vpack.c.b16 %v795, %v793
    %v830 = vpack.c.b16 %v796, %v794
    %v831 = vpack.c.b16 %v799, %v797
    %v832 = vpack.c.b16 %v800, %v798
    %865 = vmatprep.subr.bf16.mxu0 %v802
    %866 = vmatpush1.bf16.msra.mxu0 %v801
    %867 = vmatprep.subr.bf16.mxu0 %v804
    %868 = vmatpush1.bf16.msra.mxu0 %v803
    %869 = vmatprep.subr.bf16.mxu0 %v806
    %870 = vmatpush1.bf16.msra.mxu0 %v805
    %871 = vmatprep.subr.bf16.mxu0 %v808
    %872 = vmatpush1.bf16.msra.mxu0 %v807
    %873 = vmatprep.subr.bf16.mxu0 %v810
    %874 = vmatpush1.bf16.msra.mxu0 %v809
    %875 = vmatprep.subr.bf16.mxu0 %v812
    %876 = vmatpush1.bf16.msra.mxu0 %v811
    %877 = vmatprep.subr.bf16.mxu0 %v814
    %878 = vmatpush1.bf16.msra.mxu0 %v813
    %879 = vmatprep.subr.bf16.mxu0 %v816
    %880 = vmatpush1.bf16.msra.mxu0 %v815
    %881 = vmatprep.subr.bf16.mxu0 %v818
    %882 = vmatpush1.bf16.msra.mxu0 %v817
    %883 = vmatprep.subr.bf16.mxu0 %v820
    %884 = vmatpush1.bf16.msra.mxu0 %v819
    %885 = vmatprep.subr.bf16.mxu0 %v822
    %886 = vmatpush1.bf16.msra.mxu0 %v821
    %887 = vmatprep.subr.bf16.mxu0 %v824
    %888 = vmatpush1.bf16.msra.mxu0 %v823
    %889 = vmatprep.subr.bf16.mxu0 %v826
    %890 = vmatpush1.bf16.msra.mxu0 %v825
    %891 = vmatprep.subr.bf16.mxu0 %v828
    %892 = vmatpush1.bf16.msra.mxu0 %v827
    %893 = vmatprep.subr.bf16.mxu0 %v830
    %894 = vmatpush1.bf16.msra.mxu0 %v829
    %895 = vmatprep.subr.bf16.mxu0 %v832
    %896 = vmatpush1.bf16.msra.mxu0 %v831
    %897 = vmatprep.mubr.bf16.mxu0 %v691
    %898 = vmatmul.mubr.bf16.gmra.mrb[0].mxu0 %v690
    %v899 = vpop.f32.mrb[0].mxu0
    %v900 = vadd.f32 %v698, %v899
    %v901 = vpop.f32.mrb[0].mxu0
    %v902 = vadd.f32 %v702, %v901
    %v903 = vpop.f32.mrb[0].mxu0
    %v904 = vpop.f32.mrb[0].mxu0
    %905 = vdwg.mxu0
    %v906 = vmax.f32 %v900, 0.0
    %v907 = vld [vmem:[#allocation6] sm:$0xf]
    %v908 = vld [vmem:[#allocation6 + $0x4] sm:$0xf]
    %v909 = vld [vmem:[#allocation6 + $0x8] sm:$0xf]
    %v910 = vld [vmem:[#allocation6 + $0xc] sm:$0xf]
    %v911 = vld [vmem:[#allocation6 + $0x10] sm:$0xf]
    %v912 = vld [vmem:[#allocation6 + $0x14] sm:$0xf]
    %v913 = vld [vmem:[#allocation6 + $0x18] sm:$0xf]
    %v914 = vld [vmem:[#allocation6 + $0x1c] sm:$0xf]
    %v915 = vld [vmem:[#allocation6 + $0x20] sm:$0xf]
    %v916 = vld [vmem:[#allocation6 + $0x24] sm:$0xf]
    %v917 = vld [vmem:[#allocation6 + $0x28] sm:$0xf]
    %v918 = vld [vmem:[#allocation6 + $0x2c] sm:$0xf]
    %v919 = vld [vmem:[#allocation6 + $0x30] sm:$0xf]
    %v920 = vld [vmem:[#allocation6 + $0x34] sm:$0xf]
    %v921 = vld [vmem:[#allocation6 + $0x38] sm:$0xf]
    %v922 = vld [vmem:[#allocation6 + $0x3c] sm:$0xf]
    %v923 = vpack.c.bf16 %v906, %v906
    %s924 = scalar_lea.vmem [#allocation7], 4
    %v925 = vld [vmem:[%s924] ss:$8 sm:$0x3]
    %v927 = vlaneseq
    %v928 = vshrl.u32 %v927, 7
    %v929 = vsub.s32 0, %v928
    %v930 = vrot.slane %v925, %v929
    %v948 = vunpack.c.l.b16 %v907
    %v949 = vunpack.c.l.b16 %v908
    %v950 = vunpack.c.l.b16 %v909
    %v951 = vunpack.c.l.b16 %v910
    %v952 = vunpack.c.l.b16 %v911
    %v953 = vunpack.c.l.b16 %v912
    %v954 = vunpack.c.l.b16 %v913
    %v955 = vunpack.c.l.b16 %v914
    %v956 = vunpack.c.l.b16 %v915
    %v957 = vunpack.c.l.b16 %v916
    %v958 = vunpack.c.l.b16 %v917
    %v959 = vunpack.c.l.b16 %v918
    %v960 = vunpack.c.l.b16 %v919
    %v961 = vunpack.c.l.b16 %v920
    %v962 = vunpack.c.l.b16 %v921
    %v963 = vunpack.c.l.b16 %v922
    %v964 = vpack.c.b16 %v949, %v948
    %v965 = vpack.c.b16 %v951, %v950
    %v966 = vpack.c.b16 %v953, %v952
    %v967 = vpack.c.b16 %v955, %v954
    %v968 = vpack.c.b16 %v957, %v956
    %v969 = vpack.c.b16 %v959, %v958
    %v970 = vpack.c.b16 %v961, %v960
    %v971 = vpack.c.b16 %v963, %v962
    %980 = vmatprep.subr.bf16.mxu0 0
    %981 = vmatpush1.bf16.msra.mxu0 %v964
    %982 = vmatprep.subr.bf16.mxu0 0
    %983 = vmatpush1.bf16.msra.mxu0 %v965
    %984 = vmatprep.subr.bf16.mxu0 0
    %985 = vmatpush1.bf16.msra.mxu0 %v966
    %986 = vmatprep.subr.bf16.mxu0 0
    %987 = vmatpush1.bf16.msra.mxu0 %v967
    %988 = vmatprep.subr.bf16.mxu0 0
    %989 = vmatpush1.bf16.msra.mxu0 %v968
    %990 = vmatprep.subr.bf16.mxu0 0
    %991 = vmatpush1.bf16.msra.mxu0 %v969
    %992 = vmatprep.subr.bf16.mxu0 0
    %993 = vmatpush1.bf16.msra.mxu0 %v970
    %994 = vmatprep.subr.bf16.mxu0 0
    %995 = vmatpush1.bf16.msra.mxu0 %v971
    %996 = vmatprep.subr.bf16.mxu0 0
    %997 = vmatpush1.bf16.msra.mxu0 0
    %998 = vmatprep.subr.bf16.mxu0 0
    %999 = vmatpush1.bf16.msra.mxu0 0
    %1000 = vmatprep.subr.bf16.mxu0 0
    %1001 = vmatpush1.bf16.msra.mxu0 0
    %1002 = vmatprep.subr.bf16.mxu0 0
    %1003 = vmatpush1.bf16.msra.mxu0 0
    %1004 = vmatprep.subr.bf16.mxu0 0
    %1005 = vmatpush1.bf16.msra.mxu0 0
    %1006 = vmatprep.subr.bf16.mxu0 0
    %1007 = vmatpush1.bf16.msra.mxu0 0
    %1008 = vmatprep.subr.bf16.mxu0 0
    %1009 = vmatpush1.bf16.msra.mxu0 0
    %1010 = vmatprep.subr.bf16.mxu0 0
    %1011 = vmatpush1.bf16.msra.mxu0 0
    %1012 = vmatprep.mubr.bf16.mxu0 0
    %1013 = vmatmul.mubr.bf16.gmra.mrb[0].mxu0 %v923
    %v1014 = vpop.f32.mrb[0].mxu0
    %v1015 = vadd.f32 %v930, %v1014
    %v1016 = vpop.f32.mrb[0].mxu0
    %v1017 = vpop.f32.mrb[0].mxu0
    %v1018 = vpop.f32.mrb[0].mxu0
    %1019 = vdwg.mxu0
    %v1020 = vadd.f32 %v1015, %v902
    %v1021 = vmax.f32 %v1020, 0.0
    %v1022 = vld [vmem:[#allocation6 + $0x40] sm:$0xf]
    %v1023 = vld [vmem:[#allocation6 + $0x44] sm:$0xf]
    %v1024 = vld [vmem:[#allocation6 + $0x48] sm:$0xf]
    %v1025 = vld [vmem:[#allocation6 + $0x4c] sm:$0xf]
    %v1026 = vld [vmem:[#allocation6 + $0x50] sm:$0xf]
    %v1027 = vld [vmem:[#allocation6 + $0x54] sm:$0xf]
    %v1028 = vld [vmem:[#allocation6 + $0x58] sm:$0xf]
    %v1029 = vld [vmem:[#allocation6 + $0x5c] sm:$0xf]
    %v1030 = vld [vmem:[#allocation6 + $0x60] sm:$0xf]
    %v1031 = vld [vmem:[#allocation6 + $0x64] sm:$0xf]
    %v1032 = vld [vmem:[#allocation6 + $0x68] sm:$0xf]
    %v1033 = vld [vmem:[#allocation6 + $0x6c] sm:$0xf]
    %v1034 = vld [vmem:[#allocation6 + $0x70] sm:$0xf]
    %v1035 = vld [vmem:[#allocation6 + $0x74] sm:$0xf]
    %v1036 = vld [vmem:[#allocation6 + $0x78] sm:$0xf]
    %v1037 = vld [vmem:[#allocation6 + $0x7c] sm:$0xf]
    %v1038 = vpack.c.bf16 %v1021, %v1021
    %s1039 = scalar_lea.vmem [#allocation7], 5
    %v1040 = vld [vmem:[%s1039] ss:$8 sm:$0x3]
    %v1042 = vlaneseq
    %v1043 = vshrl.u32 %v1042, 7
    %v1044 = vsub.s32 0, %v1043
    %v1045 = vrot.slane %v1040, %v1044
    %v1063 = vunpack.c.l.b16 %v1022
    %v1064 = vunpack.c.l.b16 %v1023
    %v1065 = vunpack.c.l.b16 %v1024
    %v1066 = vunpack.c.l.b16 %v1025
    %v1067 = vunpack.c.l.b16 %v1026
    %v1068 = vunpack.c.l.b16 %v1027
    %v1069 = vunpack.c.l.b16 %v1028
    %v1070 = vunpack.c.l.b16 %v1029
    %v1071 = vunpack.c.l.b16 %v1030
    %v1072 = vunpack.c.l.b16 %v1031
    %v1073 = vunpack.c.l.b16 %v1032
    %v1074 = vunpack.c.l.b16 %v1033
    %v1075 = vunpack.c.l.b16 %v1034
    %v1076 = vunpack.c.l.b16 %v1035
    %v1077 = vunpack.c.l.b16 %v1036
    %v1078 = vunpack.c.l.b16 %v1037
    %v1079 = vpack.c.b16 %v1064, %v1063
    %v1080 = vpack.c.b16 %v1066, %v1065
    %v1081 = vpack.c.b16 %v1068, %v1067
    %v1082 = vpack.c.b16 %v1070, %v1069
    %v1083 = vpack.c.b16 %v1072, %v1071
    %v1084 = vpack.c.b16 %v1074, %v1073
    %v1085 = vpack.c.b16 %v1076, %v1075
    %v1086 = vpack.c.b16 %v1078, %v1077
    %1095 = vmatprep.subr.bf16.mxu0 0
    %1096 = vmatpush1.bf16.msra.mxu0 %v1079
    %1097 = vmatprep.subr.bf16.mxu0 0
    %1098 = vmatpush1.bf16.msra.mxu0 %v1080
    %1099 = vmatprep.subr.bf16.mxu0 0
    %1100 = vmatpush1.bf16.msra.mxu0 %v1081
    %1101 = vmatprep.subr.bf16.mxu0 0
    %1102 = vmatpush1.bf16.msra.mxu0 %v1082
    %1103 = vmatprep.subr.bf16.mxu0 0
    %1104 = vmatpush1.bf16.msra.mxu0 %v1083
    %1105 = vmatprep.subr.bf16.mxu0 0
    %1106 = vmatpush1.bf16.msra.mxu0 %v1084
    %1107 = vmatprep.subr.bf16.mxu0 0
    %1108 = vmatpush1.bf16.msra.mxu0 %v1085
    %1109 = vmatprep.subr.bf16.mxu0 0
    %1110 = vmatpush1.bf16.msra.mxu0 %v1086
    %1111 = vmatprep.subr.bf16.mxu0 0
    %1112 = vmatpush1.bf16.msra.mxu0 0
    %1113 = vmatprep.subr.bf16.mxu0 0
    %1114 = vmatpush1.bf16.msra.mxu0 0
    %1115 = vmatprep.subr.bf16.mxu0 0
    %1116 = vmatpush1.bf16.msra.mxu0 0
    %1117 = vmatprep.subr.bf16.mxu0 0
    %1118 = vmatpush1.bf16.msra.mxu0 0
    %1119 = vmatprep.subr.bf16.mxu0 0
    %1120 = vmatpush1.bf16.msra.mxu0 0
    %1121 = vmatprep.subr.bf16.mxu0 0
    %1122 = vmatpush1.bf16.msra.mxu0 0
    %1123 = vmatprep.subr.bf16.mxu0 0
    %1124 = vmatpush1.bf16.msra.mxu0 0
    %1125 = vmatprep.subr.bf16.mxu0 0
    %1126 = vmatpush1.bf16.msra.mxu0 0
    %1127 = vmatprep.mubr.bf16.mxu0 0
    %1128 = vmatmul.mubr.bf16.gmra.mrb[0].mxu0 %v1038
    %v1129 = vpop.f32.mrb[0].mxu0
    %v1130 = vadd.f32 %v1045, %v1129
    %v1131 = vpop.f32.mrb[0].mxu0
    %v1132 = vpop.f32.mrb[0].mxu0
    %v1133 = vpop.f32.mrb[0].mxu0
    %1134 = vdwg.mxu0
    %v1135 = vmax.f32 %v1130, 0.0
    %v1136 = vld [vmem:[#allocation6 + $0x80] sm:$0xf]
    %v1137 = vld [vmem:[#allocation6 + $0x84] sm:$0xf]
    %v1138 = vld [vmem:[#allocation6 + $0x88] sm:$0xf]
    %v1139 = vld [vmem:[#allocation6 + $0x8c] sm:$0xf]
    %v1140 = vld [vmem:[#allocation6 + $0x90] sm:$0xf]
    %v1141 = vld [vmem:[#allocation6 + $0x94] sm:$0xf]
    %v1142 = vld [vmem:[#allocation6 + $0x98] sm:$0xf]
    %v1143 = vld [vmem:[#allocation6 + $0x9c] sm:$0xf]
    %v1144 = vld [vmem:[#allocation6 + $0xa0] sm:$0xf]
    %v1145 = vld [vmem:[#allocation6 + $0xa4] sm:$0xf]
    %v1146 = vld [vmem:[#allocation6 + $0xa8] sm:$0xf]
    %v1147 = vld [vmem:[#allocation6 + $0xac] sm:$0xf]
    %v1148 = vld [vmem:[#allocation6 + $0xb0] sm:$0xf]
    %v1149 = vld [vmem:[#allocation6 + $0xb4] sm:$0xf]
    %v1150 = vld [vmem:[#allocation6 + $0xb8] sm:$0xf]
    %v1151 = vld [vmem:[#allocation6 + $0xbc] sm:$0xf]
    %v1152 = vpack.c.bf16 %v1135, %v1135
    %s1153 = scalar_lea.vmem [#allocation7], 6
    %v1154 = vld [vmem:[%s1153] ss:$8 sm:$0x3]
    %v1156 = vlaneseq
    %v1157 = vshrl.u32 %v1156, 7
    %v1158 = vsub.s32 0, %v1157
    %v1159 = vrot.slane %v1154, %v1158
    %v1177 = vunpack.c.l.b16 %v1136
    %v1178 = vunpack.c.l.b16 %v1137
    %v1179 = vunpack.c.l.b16 %v1138
    %v1180 = vunpack.c.l.b16 %v1139
    %v1181 = vunpack.c.l.b16 %v1140
    %v1182 = vunpack.c.l.b16 %v1141
    %v1183 = vunpack.c.l.b16 %v1142
    %v1184 = vunpack.c.l.b16 %v1143
    %v1185 = vunpack.c.l.b16 %v1144
    %v1186 = vunpack.c.l.b16 %v1145
    %v1187 = vunpack.c.l.b16 %v1146
    %v1188 = vunpack.c.l.b16 %v1147
    %v1189 = vunpack.c.l.b16 %v1148
    %v1190 = vunpack.c.l.b16 %v1149
    %v1191 = vunpack.c.l.b16 %v1150
    %v1192 = vunpack.c.l.b16 %v1151
    %v1193 = vpack.c.b16 %v1178, %v1177
    %v1194 = vpack.c.b16 %v1180, %v1179
    %v1195 = vpack.c.b16 %v1182, %v1181
    %v1196 = vpack.c.b16 %v1184, %v1183
    %v1197 = vpack.c.b16 %v1186, %v1185
    %v1198 = vpack.c.b16 %v1188, %v1187
    %v1199 = vpack.c.b16 %v1190, %v1189
    %v1200 = vpack.c.b16 %v1192, %v1191
    %1209 = vmatprep.subr.bf16.mxu0 0
    %1210 = vmatpush1.bf16.msra.mxu0 %v1193
    %1211 = vmatprep.subr.bf16.mxu0 0
    %1212 = vmatpush1.bf16.msra.mxu0 %v1194
    %1213 = vmatprep.subr.bf16.mxu0 0
    %1214 = vmatpush1.bf16.msra.mxu0 %v1195
    %1215 = vmatprep.subr.bf16.mxu0 0
    %1216 = vmatpush1.bf16.msra.mxu0 %v1196
    %1217 = vmatprep.subr.bf16.mxu0 0
    %1218 = vmatpush1.bf16.msra.mxu0 %v1197
    %1219 = vmatprep.subr.bf16.mxu0 0
    %1220 = vmatpush1.bf16.msra.mxu0 %v1198
    %1221 = vmatprep.subr.bf16.mxu0 0
    %1222 = vmatpush1.bf16.msra.mxu0 %v1199
    %1223 = vmatprep.subr.bf16.mxu0 0
    %1224 = vmatpush1.bf16.msra.mxu0 %v1200
    %1225 = vmatprep.subr.bf16.mxu0 0
    %1226 = vmatpush1.bf16.msra.mxu0 0
    %1227 = vmatprep.subr.bf16.mxu0 0
    %1228 = vmatpush1.bf16.msra.mxu0 0
    %1229 = vmatprep.subr.bf16.mxu0 0
    %1230 = vmatpush1.bf16.msra.mxu0 0
    %1231 = vmatprep.subr.bf16.mxu0 0
    %1232 = vmatpush1.bf16.msra.mxu0 0
    %1233 = vmatprep.subr.bf16.mxu0 0
    %1234 = vmatpush1.bf16.msra.mxu0 0
    %1235 = vmatprep.subr.bf16.mxu0 0
    %1236 = vmatpush1.bf16.msra.mxu0 0
    %1237 = vmatprep.subr.bf16.mxu0 0
    %1238 = vmatpush1.bf16.msra.mxu0 0
    %1239 = vmatprep.subr.bf16.mxu0 0
    %1240 = vmatpush1.bf16.msra.mxu0 0
    %1241 = vmatprep.mubr.bf16.mxu0 0
    %1242 = vmatmul.mubr.bf16.gmra.mrb[0].mxu0 %v1152
    %v1243 = vpop.f32.mrb[0].mxu0
    %v1244 = vadd.f32 %v1159, %v1243
    %v1245 = vpop.f32.mrb[0].mxu0
    %v1246 = vpop.f32.mrb[0].mxu0
    %v1247 = vpop.f32.mrb[0].mxu0
    %1248 = vdwg.mxu0
    %v1249 = vadd.f32 %v1244, %v1021
    %v1250 = vmax.f32 %v1249, 0.0
    %v1251 = vld [vmem:[#allocation6 + $0xc0] sm:$0xf]
    %v1252 = vld [vmem:[#allocation6 + $0xc4] sm:$0xf]
    %v1253 = vld [vmem:[#allocation6 + $0xc8] sm:$0xf]
    %v1254 = vld [vmem:[#allocation6 + $0xcc] sm:$0xf]
    %v1255 = vld [vmem:[#allocation6 + $0xd0] sm:$0xf]
    %v1256 = vld [vmem:[#allocation6 + $0xd4] sm:$0xf]
    %v1257 = vld [vmem:[#allocation6 + $0xd8] sm:$0xf]
    %v1258 = vld [vmem:[#allocation6 + $0xdc] sm:$0xf]
    %v1259 = vld [vmem:[#allocation6 + $0xe0] sm:$0xf]
    %v1260 = vld [vmem:[#allocation6 + $0xe4] sm:$0xf]
    %v1261 = vld [vmem:[#allocation6 + $0xe8] sm:$0xf]
    %v1262 = vld [vmem:[#allocation6 + $0xec] sm:$0xf]
    %v1263 = vld [vmem:[#allocation6 + $0xf0] sm:$0xf]
    %v1264 = vld [vmem:[#allocation6 + $0xf4] sm:$0xf]
    %v1265 = vld [vmem:[#allocation6 + $0xf8] sm:$0xf]
    %v1266 = vld [vmem:[#allocation6 + $0xfc] sm:$0xf]
    %v1267 = vpack.c.bf16 %v1250, %v1250
    %s1268 = scalar_lea.vmem [#allocation7], 7
    %v1269 = vld [vmem:[%s1268] ss:$8 sm:$0x3]
    %v1271 = vlaneseq
    %v1272 = vshrl.u32 %v1271, 7
    %v1273 = vsub.s32 0, %v1272
    %v1274 = vrot.slane %v1269, %v1273
    %v1292 = vunpack.c.l.b16 %v1251
    %v1293 = vunpack.c.l.b16 %v1252
    %v1294 = vunpack.c.l.b16 %v1253
    %v1295 = vunpack.c.l.b16 %v1254
    %v1296 = vunpack.c.l.b16 %v1255
    %v1297 = vunpack.c.l.b16 %v1256
    %v1298 = vunpack.c.l.b16 %v1257
    %v1299 = vunpack.c.l.b16 %v1258
    %v1300 = vunpack.c.l.b16 %v1259
    %v1301 = vunpack.c.l.b16 %v1260
    %v1302 = vunpack.c.l.b16 %v1261
    %v1303 = vunpack.c.l.b16 %v1262
    %v1304 = vunpack.c.l.b16 %v1263
    %v1305 = vunpack.c.l.b16 %v1264
    %v1306 = vunpack.c.l.b16 %v1265
    %v1307 = vunpack.c.l.b16 %v1266
    %v1308 = vpack.c.b16 %v1293, %v1292
    %v1309 = vpack.c.b16 %v1295, %v1294
    %v1310 = vpack.c.b16 %v1297, %v1296
    %v1311 = vpack.c.b16 %v1299, %v1298
    %v1312 = vpack.c.b16 %v1301, %v1300
    %v1313 = vpack.c.b16 %v1303, %v1302
    %v1314 = vpack.c.b16 %v1305, %v1304
    %v1315 = vpack.c.b16 %v1307, %v1306
    %1324 = vmatprep.subr.bf16.mxu0 0
    %1325 = vmatpush1.bf16.msra.mxu0 %v1308
    %1326 = vmatprep.subr.bf16.mxu0 0
    %1327 = vmatpush1.bf16.msra.mxu0 %v1309
    %1328 = vmatprep.subr.bf16.mxu0 0
    %1329 = vmatpush1.bf16.msra.mxu0 %v1310
    %1330 = vmatprep.subr.bf16.mxu0 0
    %1331 = vmatpush1.bf16.msra.mxu0 %v1311
    %1332 = vmatprep.subr.bf16.mxu0 0
    %1333 = vmatpush1.bf16.msra.mxu0 %v1312
    %1334 = vmatprep.subr.bf16.mxu0 0
    %1335 = vmatpush1.bf16.msra.mxu0 %v1313
    %1336 = vmatprep.subr.bf16.mxu0 0
    %1337 = vmatpush1.bf16.msra.mxu0 %v1314
    %1338 = vmatprep.subr.bf16.mxu0 0
    %1339 = vmatpush1.bf16.msra.mxu0 %v1315
    %1340 = vmatprep.subr.bf16.mxu0 0
    %1341 = vmatpush1.bf16.msra.mxu0 0
    %1342 = vmatprep.subr.bf16.mxu0 0
    %1343 = vmatpush1.bf16.msra.mxu0 0
    %1344 = vmatprep.subr.bf16.mxu0 0
    %1345 = vmatpush1.bf16.msra.mxu0 0
    %1346 = vmatprep.subr.bf16.mxu0 0
    %1347 = vmatpush1.bf16.msra.mxu0 0
    %1348 = vmatprep.subr.bf16.mxu0 0
    %1349 = vmatpush1.bf16.msra.mxu0 0
    %1350 = vmatprep.subr.bf16.mxu0 0
    %1351 = vmatpush1.bf16.msra.mxu0 0
    %1352 = vmatprep.subr.bf16.mxu0 0
    %1353 = vmatpush1.bf16.msra.mxu0 0
    %1354 = vmatprep.subr.bf16.mxu0 0
    %1355 = vmatpush1.bf16.msra.mxu0 0
    %1356 = vmatprep.mubr.bf16.mxu0 0
    %1357 = vmatmul.mubr.bf16.gmra.mrb[0].mxu0 %v1267
    %v1358 = vpop.f32.mrb[0].mxu0
    %v1359 = vadd.f32 %v1274, %v1358
    %v1360 = vpop.f32.mrb[0].mxu0
    %v1361 = vpop.f32.mrb[0].mxu0
    %v1362 = vpop.f32.mrb[0].mxu0
    %1363 = vdwg.mxu0
    %v1364 = vmax.f32 %v1359, 0.0
    %v1365 = vld [vmem:[#allocation6 + $0x100] sm:$0xf]
    %v1366 = vld [vmem:[#allocation6 + $0x104] sm:$0xf]
    %v1367 = vld [vmem:[#allocation6 + $0x108] sm:$0xf]
    %v1368 = vld [vmem:[#allocation6 + $0x10c] sm:$0xf]
    %v1369 = vld [vmem:[#allocation6 + $0x110] sm:$0xf]
    %v1370 = vld [vmem:[#allocation6 + $0x114] sm:$0xf]
    %v1371 = vld [vmem:[#allocation6 + $0x118] sm:$0xf]
    %v1372 = vld [vmem:[#allocation6 + $0x11c] sm:$0xf]
    %v1373 = vpack.c.bf16 %v1364, %v1364
    %v1382 = vunpack.c.l.b16 %v1365
    %v1383 = vunpack.c.l.b16 %v1366
    %v1384 = vunpack.c.l.b16 %v1367
    %v1385 = vunpack.c.l.b16 %v1368
    %v1386 = vunpack.c.l.b16 %v1369
    %v1387 = vunpack.c.l.b16 %v1370
    %v1388 = vunpack.c.l.b16 %v1371
    %v1389 = vunpack.c.l.b16 %v1372
    %v1390 = vpack.c.b16 %v1383, %v1382
    %v1391 = vpack.c.b16 %v1385, %v1384
    %v1392 = vpack.c.b16 %v1387, %v1386
    %v1393 = vpack.c.b16 %v1389, %v1388
    %vm1398 = vcmask 523264
    %v1400 = vsel %vm1398, %v1373, 0
    %1402 = vmatprep.subr.bf16.mxu0 0
    %1403 = vmatpush1.bf16.msra.mxu0 %v1390
    %1404 = vmatprep.subr.bf16.mxu0 0
    %1405 = vmatpush1.bf16.msra.mxu0 %v1391
    %1406 = vmatprep.subr.bf16.mxu0 0
    %1407 = vmatpush1.bf16.msra.mxu0 %v1392
    %1408 = vmatprep.subr.bf16.mxu0 0
    %1409 = vmatpush1.bf16.msra.mxu0 %v1393
    %1410 = vmatprep.subr.bf16.mxu0 0
    %1411 = vmatpush1.bf16.msra.mxu0 0
    %1412 = vmatprep.subr.bf16.mxu0 0
    %1413 = vmatpush1.bf16.msra.mxu0 0
    %1414 = vmatprep.subr.bf16.mxu0 0
    %1415 = vmatpush1.bf16.msra.mxu0 0
    %1416 = vmatprep.subr.bf16.mxu0 0
    %1417 = vmatpush1.bf16.msra.mxu0 0
    %1418 = vmatprep.subr.bf16.mxu0 0
    %1419 = vmatpush1.bf16.msra.mxu0 0
    %1420 = vmatprep.subr.bf16.mxu0 0
    %1421 = vmatpush1.bf16.msra.mxu0 0
    %1422 = vmatprep.subr.bf16.mxu0 0
    %1423 = vmatpush1.bf16.msra.mxu0 0
    %1424 = vmatprep.subr.bf16.mxu0 0
    %1425 = vmatpush1.bf16.msra.mxu0 0
    %1426 = vmatprep.subr.bf16.mxu0 0
    %1427 = vmatpush1.bf16.msra.mxu0 0
    %1428 = vmatprep.subr.bf16.mxu0 0
    %1429 = vmatpush1.bf16.msra.mxu0 0
    %1430 = vmatprep.subr.bf16.mxu0 0
    %1431 = vmatpush1.bf16.msra.mxu0 0
    %1432 = vmatprep.subr.bf16.mxu0 0
    %1433 = vmatpush1.bf16.msra.mxu0 0
    %1434 = vmatprep.mubr.bf16.mxu0 0
    %1435 = vmatmul.mubr.bf16.gmra.mrb[0].mxu0 %v1400
    %v1436 = vpop.f32.mrb[0].mxu0
    %v1437 = vadd.f32 0.0, %v1436
    %v1438 = vpop.f32.mrb[0].mxu0
    %v1439 = vpop.f32.mrb[0].mxu0
    %v1440 = vpop.f32.mrb[0].mxu0
    %1441 = vdwg.mxu0
    %s1442 = scalar_lea.vmem [#allocation7], 16
    %v1443 = vld [vmem:[%s1442] ss:$8 sm:$0x3]
    %v1445 = vlaneseq
    %v1446 = vshrl.u32 %v1445, 7
    %v1447 = vsub.s32 0, %v1446
    %v1448 = vrot.slane %v1443, %v1447
    %v1450 = vadd.f32 %v1437, %v1448
    %1452 = vrot.lane.b32.xlu0 %v1359, 64
    %v1453 = vpop.permute.xlu0 %1452
    %v1455 = vadd.f32 %v1450, %v1453
    %v1456 = vmax.f32 %v1455, 0.0
    %v1457 = vld [vmem:[#allocation6 + $0x120] sm:$0xf]
    %v1458 = vld [vmem:[#allocation6 + $0x124] sm:$0xf]
    %v1459 = vld [vmem:[#allocation6 + $0x128] sm:$0xf]
    %v1460 = vld [vmem:[#allocation6 + $0x12c] sm:$0xf]
    %v1461 = vld [vmem:[#allocation6 + $0x130] sm:$0xf]
    %v1462 = vld [vmem:[#allocation6 + $0x134] sm:$0xf]
    %v1463 = vld [vmem:[#allocation6 + $0x138] sm:$0xf]
    %v1464 = vld [vmem:[#allocation6 + $0x13c] sm:$0xf]
    %v1465 = vpack.c.bf16 %v1456, %v1456
    %s1466 = scalar_lea.vmem [#allocation7], 17
    %v1467 = vld [vmem:[%s1466] ss:$8 sm:$0x3]
    %v1469 = vlaneseq
    %v1470 = vshrl.u32 %v1469, 7
    %v1471 = vsub.s32 0, %v1470
    %v1472 = vrot.slane %v1467, %v1471
    %v1482 = vunpack.c.l.b16 %v1457
    %v1483 = vunpack.c.l.b16 %v1458
    %v1484 = vunpack.c.l.b16 %v1459
    %v1485 = vunpack.c.l.b16 %v1460
    %v1486 = vunpack.c.l.b16 %v1461
    %v1487 = vunpack.c.l.b16 %v1462
    %v1488 = vunpack.c.l.b16 %v1463
    %v1489 = vunpack.c.l.b16 %v1464
    %v1490 = vpack.c.b16 %v1483, %v1482
    %v1491 = vpack.c.b16 %v1485, %v1484
    %v1492 = vpack.c.b16 %v1487, %v1486
    %v1493 = vpack.c.b16 %v1489, %v1488
    %v1499 = vsel %vm1398, %v1465, 0
    %1501 = vmatprep.subr.bf16.mxu0 0
    %1502 = vmatpush1.bf16.msra.mxu0 %v1490
    %1503 = vmatprep.subr.bf16.mxu0 0
    %1504 = vmatpush1.bf16.msra.mxu0 %v1491
    %1505 = vmatprep.subr.bf16.mxu0 0
    %1506 = vmatpush1.bf16.msra.mxu0 %v1492
    %1507 = vmatprep.subr.bf16.mxu0 0
    %1508 = vmatpush1.bf16.msra.mxu0 %v1493
    %1509 = vmatprep.subr.bf16.mxu0 0
    %1510 = vmatpush1.bf16.msra.mxu0 0
    %1511 = vmatprep.subr.bf16.mxu0 0
    %1512 = vmatpush1.bf16.msra.mxu0 0
    %1513 = vmatprep.subr.bf16.mxu0 0
    %1514 = vmatpush1.bf16.msra.mxu0 0
    %1515 = vmatprep.subr.bf16.mxu0 0
    %1516 = vmatpush1.bf16.msra.mxu0 0
    %1517 = vmatprep.subr.bf16.mxu0 0
    %1518 = vmatpush1.bf16.msra.mxu0 0
    %1519 = vmatprep.subr.bf16.mxu0 0
    %1520 = vmatpush1.bf16.msra.mxu0 0
    %1521 = vmatprep.subr.bf16.mxu0 0
    %1522 = vmatpush1.bf16.msra.mxu0 0
    %1523 = vmatprep.subr.bf16.mxu0 0
    %1524 = vmatpush1.bf16.msra.mxu0 0
    %1525 = vmatprep.subr.bf16.mxu0 0
    %1526 = vmatpush1.bf16.msra.mxu0 0
    %1527 = vmatprep.subr.bf16.mxu0 0
    %1528 = vmatpush1.bf16.msra.mxu0 0
    %1529 = vmatprep.subr.bf16.mxu0 0
    %1530 = vmatpush1.bf16.msra.mxu0 0
    %1531 = vmatprep.subr.bf16.mxu0 0
    %1532 = vmatpush1.bf16.msra.mxu0 0
    %1533 = vmatprep.mubr.bf16.mxu0 0
    %1534 = vmatmul.mubr.bf16.gmra.mrb[0].mxu0 %v1499
    %v1535 = vpop.f32.mrb[0].mxu0
    %v1536 = vadd.f32 %v1472, %v1535
    %v1537 = vpop.f32.mrb[0].mxu0
    %v1538 = vpop.f32.mrb[0].mxu0
    %v1539 = vpop.f32.mrb[0].mxu0
    %1540 = vdwg.mxu0
    %1541 = vst [vmem:[%s4] sm:$0xff] %v1536
    // Predicated region
    $region34: #{_forward.1} parent=1 // pred_check
      _
    $region35: #{_forward.1} parent=1 // pred_check_branch
      %1543 = sbr.rel (0) target = $region37
    $region36: #{_forward.1} parent=1 // pred_region
      _
    $region37: #{_forward.1} parent=1 // pred_fallthru
      _
    // Predicated region
    $region38: #{_forward.1} parent=1 // pred_check
      _
    $region39: #{_forward.1} parent=1 // pred_check_branch
      %1545 = sbr.rel (0) target = $region41
    $region40: #{_forward.1} parent=1 // pred_region
      _
    $region41: #{_forward.1} parent=1 // pred_fallthru
      _
    %1546 = vsyncpa [#allocation3], 1
    %1547 = vsyncpa [#allocation5], 1
    %1548 = vsyncpa [#allocation8], 1

</llo_original>
